<compile_context>
chip_gen: v7x
topology: tpu7x:2x2x1
jax: 0.10.0
libtpu: 0.0.40
codegen_flags: <defaults>
</compile_context>

<pallas_src>
import functools
import numpy as np

import jax
import jax.numpy as jnp
from jax.experimental import pallas as pl
from jax.experimental.pallas import tpu as pltpu


# ----------------------------------------------------------------------------
# Synthetic (deterministic, in-script) mini YOLOv3 module definitions.
# Mirrors the darknet-cfg structure consumed by create_modules().
# ----------------------------------------------------------------------------
MODULE_DEFS = [
    {'type': 'convolutional', 'batch_normalize': '1', 'filters': '8',  'size': '3', 'stride': '1', 'activation': 'leaky'},
    {'type': 'convolutional', 'batch_normalize': '1', 'filters': '16', 'size': '3', 'stride': '2', 'activation': 'leaky'},
    {'type': 'convolutional', 'batch_normalize': '1', 'filters': '8',  'size': '1', 'stride': '1', 'activation': 'leaky'},
    {'type': 'convolutional', 'batch_normalize': '1', 'filters': '16', 'size': '3', 'stride': '1', 'activation': 'leaky'},
    {'type': 'shortcut', 'from': '-3', 'activation': 'linear'},
    {'type': 'convolutional', 'batch_normalize': '1', 'filters': '32', 'size': '3', 'stride': '2', 'activation': 'leaky'},
    {'type': 'convolutional', 'batch_normalize': '0', 'filters': '24', 'size': '1', 'stride': '1', 'activation': 'linear'},
    {'type': 'yolo', 'mask': '0,1,2', 'anchors': '2,3, 4,5, 6,8, 8,10, 10,12, 12,14', 'classes': '3'},
    {'type': 'route', 'layers': '-4'},
    {'type': 'convolutional', 'batch_normalize': '1', 'filters': '8', 'size': '1', 'stride': '1', 'activation': 'leaky'},
    {'type': 'upsample', 'stride': '2'},
    {'type': 'route', 'layers': '-1, 0'},
    {'type': 'maxpool', 'size': '2', 'stride': '1'},
    {'type': 'convolutional', 'batch_normalize': '0', 'filters': '24', 'size': '1', 'stride': '1', 'activation': 'linear'},
    {'type': 'yolo', 'mask': '3,4,5', 'anchors': '2,3, 4,5, 6,8, 8,10, 10,12, 12,14', 'classes': '3'},
]

IN_CHANNELS = 4
IMG_SIZE = 16
BATCH = 2
BN_EPS = 1e-5

LEAKY_ALPHA = 0.1
VMEM_LIMIT_BYTES = 32 * 1024 * 1024     # explicit, safe on v7x (64 MiB VMEM)
VMEM_TILE_BUDGET = 20 * 1024 * 1024     # per-step double-buffered budget


def _round_up(x, m):
    return ((x + m - 1) // m) * m


def _pick_m_tile(kp, np_, mp, out_itemsize):
    """Largest M tile (multiple of 128, divisor of Mp) fitting the VMEM budget."""
    cands = [m for m in (mp, 8192, 4096, 2048, 1024, 512, 256, 128)
             if 128 <= m <= mp and mp % m == 0]
    for mt in cands:
        use = 2 * (kp * mt * 2 + np_ * mt * out_itemsize) + np_ * kp * 2
        if use <= VMEM_TILE_BUDGET:
            return mt
    return 128


# ----------------------------------------------------------------------------
# In-kernel decode math (shared by fused head kernel and standalone fallback).
# Row-only quantities computed on (Rp,1), lane-only on (1,Mt); bit ops when
# no / nx / ny are powers of two; exact sigmoid (no approx reciprocal).
# ----------------------------------------------------------------------------
def _mod_div(idx, d):
    d = int(d)
    if d & (d - 1) == 0:
        shift = d.bit_length() - 1
        return idx & (d - 1), idx >> shift
    return idx % d, idx // d


def _decode_block(acc, *, no, nx, ny, stride, anchors, m_off):
    """acc: (Rp, Mt) f32 raw head conv output, rows = anchor*no + field,
    lanes = flattened (B, ny, nx) + m_off.  Returns decoded (Rp, Mt) f32."""
    rp, mt = acc.shape
    row = jax.lax.broadcasted_iota(jnp.int32, (rp, 1), 0)
    lane = jax.lax.broadcasted_iota(jnp.int32, (1, mt), 1) + m_off

    r, a = _mod_div(row, no)            # field index, anchor index  (Rp,1)
    gx_i, q = _mod_div(lane, nx)
    gy_i, _ = _mod_div(q, ny)
    gx = gx_i.astype(jnp.float32)       # (1,Mt)
    gy = gy_i.astype(jnp.float32)

    aw = jnp.full(a.shape, anchors[-1][0], jnp.float32)
    ah = jnp.full(a.shape, anchors[-1][1], jnp.float32)
    for j in range(len(anchors) - 2, -1, -1):
        aw = jnp.where(a == j, jnp.float32(anchors[j][0]), aw)
        ah = jnp.where(a == j, jnp.float32(anchors[j][1]), ah)

    grid = jnp.where(r == 0, gx, gy)    # (Rp,Mt) via broadcast
    anc = jnp.where(r == 2, aw, ah)     # (Rp,1)

    ex = jnp.exp(acc)                   # single EUP transcendental per element
    sig = jnp.where(acc > 20.0, jnp.float32(1.0), ex / (1.0 + ex))

    xy = (sig + grid) * stride
    wh = ex * anc
    return jnp.where(r < 2, xy, jnp.where(r < 4, wh, sig))


# ----------------------------------------------------------------------------
# Pallas kernels.  Matmul:  W'(Np,Kp) @ patches^T(Kp,Mt)  with the bias folded
# into the last real K column (patches carry a constant-1 row).  M sits on the
# 128-lane axis of the output, so stores are unmasked full-vreg ops.
# ----------------------------------------------------------------------------
def _conv_leaky_kernel(w_ref, p_ref, o_ref, *, alpha):
    acc = jnp.dot(w_ref[...], p_ref[...], preferred_element_type=jnp.float32)
    o_ref[...] = jnp.maximum(acc, alpha * acc).astype(o_ref.dtype)


def _conv_linear_kernel(w_ref, p_ref, o_ref):
    acc = jnp.dot(w_ref[...], p_ref[...], preferred_element_type=jnp.float32)
    o_ref[...] = acc.astype(o_ref.dtype)


def _conv_yolo_kernel(w_ref, p_ref, o_ref, *, m_tile, no, nx, ny, stride, anchors):
    acc = jnp.dot(w_ref[...], p_ref[...], preferred_element_type=jnp.float32)
    m_off = pl.program_id(0) * m_tile
    o_ref[...] = _decode_block(acc, no=no, nx=nx, ny=ny, stride=stride,
                               anchors=anchors, m_off=m_off)


def _yolo_decode_kernel(x_ref, o_ref, *, m_tile, no, nx, ny, stride, anchors):
    m_off = pl.program_id(0) * m_tile
    o_ref[...] = _decode_block(x_ref[...].astype(jnp.float32), no=no, nx=nx,
                               ny=ny, stride=stride, anchors=anchors, m_off=m_off)


def fused_conv_matmul_t(patches_t, w_pad, activation, decode_cfg=None):
    """patches_t: (K, M) bf16;  w_pad: (Np, Kp) bf16 with bias in column K.
    Returns (Np, Mp), bf16 for 'leaky' intermediates, f32 for heads/linear."""
    K, M = patches_t.shape
    Np, Kp = w_pad.shape
    Mp = _round_up(M, 128)

    out_dtype = jnp.bfloat16 if (decode_cfg is None and activation == 'leaky') else jnp.float32
    Mt = _pick_m_tile(Kp, Np, Mp, jnp.dtype(out_dtype).itemsize)

    if decode_cfg is not None:
        kern = functools.partial(_conv_yolo_kernel, m_tile=Mt, **decode_cfg)
    elif activation == 'leaky':
        kern = functools.partial(_conv_leaky_kernel, alpha=LEAKY_ALPHA)
    else:
        kern = _conv_linear_kernel

    ones = jnp.ones((1, M), jnp.bfloat16)                 # bias row
    p = jnp.concatenate([patches_t.astype(jnp.bfloat16), ones], axis=0)
    p = jnp.pad(p, ((0, Kp - (K + 1)), (0, Mp - M)))

    return pl.pallas_call(
        kern,
        out_shape=jax.ShapeDtypeStruct((Np, Mp), out_dtype),
        grid=(Mp // Mt,),
        in_specs=[
            pl.BlockSpec((Np, Kp), lambda i: (0, 0)),     # weights stay resident
            pl.BlockSpec((Kp, Mt), lambda i: (0, i)),
        ],
        out_specs=pl.BlockSpec((Np, Mt), lambda i: (0, i)),
        compiler_params=pltpu.CompilerParams(
            dimension_semantics=("parallel",),
            vmem_limit_bytes=VMEM_LIMIT_BYTES),
    )(w_pad, p)


# ----------------------------------------------------------------------------
# Plain-JAX glue on bf16 CBHW activations: im2col (transposed), maxpool,
# upsample.  K order = (cin, kh, kw), matching weight.reshape(Cout, Cin*k*k).
# ----------------------------------------------------------------------------
def im2col_t(x_cb, k, stride, pad):
    C, B, H, W = x_cb.shape
    if k == 1 and stride == 1:
        return x_cb.reshape(C, B * H * W), H, W
    xp = jnp.pad(x_cb, ((0, 0), (0, 0), (pad, pad), (pad, pad)))
    Ho = (H + 2 * pad - k) // stride + 1
    Wo = (W + 2 * pad - k) // stride + 1
    cols = []
    for kh in range(k):
        for kw in range(k):
            cols.append(xp[:, :, kh:kh + stride * Ho:stride, kw:kw + stride * Wo:stride])
    col = jnp.stack(cols, axis=1)                       # (C, k*k, B, Ho, Wo)
    return col.reshape(C * k * k, B * Ho * Wo), Ho, Wo


def conv_block(x_cb, p, k, stride, activation, yolo_anchors=None, img_size=None):
    C, B, H, W = x_cb.shape
    pad = (k - 1) // 2
    cols_t, Ho, Wo = im2col_t(x_cb, k, stride, pad)     # (K, M) bf16
    cout = p['cout']
    M = B * Ho * Wo

    decode_cfg = None
    if yolo_anchors is not None:
        na = int(yolo_anchors.shape[0])
        no = cout // na
        decode_cfg = dict(
            no=no, nx=Wo, ny=Ho, stride=float(img_size // Ho),
            anchors=tuple((float(aw), float(ah)) for aw, ah in yolo_anchors.tolist()))

    out_t = fused_conv_matmul_t(cols_t, p['w_pad'], activation, decode_cfg)
    out = out_t[:cout, :M]

    if decode_cfg is None:
        return out.reshape(cout, B, Ho, Wo)             # CBHW, no transpose
    na = int(yolo_anchors.shape[0])
    no = decode_cfg['no']
    # -> (B, na, ny, nx, no) -> (B, na*ny*nx, no), matching torch .view(bs,-1,no)
    return out.reshape(na, no, B, Ho, Wo).transpose(2, 0, 3, 4, 1).reshape(B, na * Ho * Wo, no)


def yolo_layer(x_cb, img_size, anchors):
    """Standalone decode fallback (used only if the head conv cannot be fused)."""
    na = int(anchors.shape[0])
    C, B, ny, nx = x_cb.shape
    no = C // na
    stride = img_size // ny
    R, L = na * no, B * ny * nx
    Rp, Lp = _round_up(R, 8), _round_up(L, 128)

    xk = jnp.pad(x_cb.astype(jnp.float32).reshape(R, L), ((0, Rp - R), (0, Lp - L)))
    kern = functools.partial(
        _yolo_decode_kernel, m_tile=Lp, no=no, nx=nx, ny=ny, stride=float(stride),
        anchors=tuple((float(aw), float(ah)) for aw, ah in anchors.tolist()))
    out = pl.pallas_call(
        kern,
        out_shape=jax.ShapeDtypeStruct((Rp, Lp), jnp.float32),
        grid=(1,),
        in_specs=[pl.BlockSpec((Rp, Lp), lambda i: (0, 0))],
        out_specs=pl.BlockSpec((Rp, Lp), lambda i: (0, 0)),
        compiler_params=pltpu.CompilerParams(vmem_limit_bytes=VMEM_LIMIT_BYTES),
    )(xk)
    out = out[:R, :L].reshape(na, no, B, ny, nx)
    return out.transpose(2, 0, 3, 4, 1).reshape(B, na * ny * nx, no)


def maxpool_2x2_s1(x_cb):
    # nn.ZeroPad2d((0,1,0,1)) + MaxPool2d(kernel=2, stride=1, padding=0)
    xp = jnp.pad(x_cb, ((0, 0), (0, 0), (0, 1), (0, 1)))
    return jnp.maximum(
        jnp.maximum(xp[:, :, :-1, :-1], xp[:, :, 1:, :-1]),
        jnp.maximum(xp[:, :, :-1, 1:], xp[:, :, 1:, 1:]),
    )


def upsample_nearest(x_cb, scale):
    return jnp.repeat(jnp.repeat(x_cb, scale, axis=2), scale, axis=3)


# ----------------------------------------------------------------------------
# Deterministic parameter construction (shapes follow create_modules()).
# BN scale and the bias are folded into the weights; weights are pre-reshaped,
# padded to (Cout->16, K+1->128) granules and cast to bf16 once here.
# ----------------------------------------------------------------------------
def build_params(module_defs, in_channels, key):
    params = []
    out_filters = [in_channels]
    for mdef in module_defs:
        t = mdef['type']
        p = None
        filters = out_filters[-1]
        if t == 'convolutional':
            bn = int(mdef['batch_normalize'])
            filters = int(mdef['filters'])
            k = int(mdef['size'])
            cin = out_filters[-1]
            key, wk, bk = jax.random.split(key, 3)
            fan_in = cin * k * k
            w = jax.random.normal(wk, (filters, cin, k, k), jnp.float32) * (0.5 / np.sqrt(fan_in))
            if bn:
                gamma = jnp.ones((filters,), jnp.float32)
                beta = jnp.zeros((filters,), jnp.float32)
                rmean = jnp.zeros((filters,), jnp.float32)
                rvar = jnp.ones((filters,), jnp.float32)
                scale = gamma / jnp.sqrt(rvar + BN_EPS)
                bias = beta - rmean * scale
            else:
                scale = jnp.ones((filters,), jnp.float32)
                bias = jax.random.normal(bk, (filters,), jnp.float32) * 0.1
            K = cin * k * k
            Kp = _round_up(K + 1, 128)            # +1 column for the folded bias
            Np = _round_up(filters, 16)           # bf16 sublane packing
            w2d = w.reshape(filters, K) * scale[:, None]     # fold BN scale
            w_full = jnp.zeros((Np, Kp), jnp.float32)
            w_full = w_full.at[:filters, :K].set(w2d)
            w_full = w_full.at[:filters, K].set(bias)        # fold bias column
            p = {'w_pad': w_full.astype(jnp.bfloat16), 'cout': filters}
        elif t == 'route':
            layers = [int(l) for l in mdef['layers'].split(',')]
            filters = sum(out_filters[1:][l] for l in layers) // int(mdef.get('groups', 1))
        elif t == 'shortcut':
            filters = out_filters[1:][int(mdef['from'])]
        elif t == 'yolo':
            mask = [int(m) for m in mdef['mask'].split(',')]
            a = [int(v) for v in mdef['anchors'].split(',')]
            a = [(a[j], a[j + 1]) for j in range(0, len(a), 2)]
            a = [a[j] for j in mask]
            p = {'anchors': np.array(a, np.float32)}          # static constants
        params.append(p)
        out_filters.append(filters)
    return params


# ----------------------------------------------------------------------------
# Darknet / YoloV3 forward (network part, returns concatenated yolo outputs).
# ----------------------------------------------------------------------------
def _referenced_layers(module_defs):
    """Module indices whose outputs are read by a later route/shortcut."""
    ref = set()
    for i, mdef in enumerate(module_defs):
        if mdef['type'] == 'route':
            for l in mdef['layers'].split(','):
                li = int(l)
                ref.add(li if li >= 0 else i + li)
        elif mdef['type'] == 'shortcut':
            li = int(mdef['from'])
            ref.add(li if li >= 0 else i + li)
            ref.add(i - 1)
    return ref


def _is_fused_head(i, module_defs, referenced):
    if i < 0 or i >= len(module_defs) - 1:
        return False
    m, nxt = module_defs[i], module_defs[i + 1]
    return (m['type'] == 'convolutional' and m['activation'] == 'linear'
            and nxt['type'] == 'yolo' and i not in referenced)


def yolov3_network_forward(x_nchw, params, module_defs):
    img_size = x_nchw.shape[2]
    referenced = _referenced_layers(module_defs)
    # NCHW -> CBHW once at the entry; whole activation chain in bf16.
    x = jnp.transpose(x_nchw, (1, 0, 2, 3)).astype(jnp.bfloat16)
    layer_outputs, yolo_outputs = [], []
    for i, mdef in enumerate(module_defs):
        t = mdef['type']
        if t == 'convolutional':
            if _is_fused_head(i, module_defs, referenced):
                # conv + YOLO decode fused into one kernel epilogue
                x = conv_block(x, params[i], int(mdef['size']), int(mdef['stride']),
                               mdef['activation'],
                               yolo_anchors=params[i + 1]['anchors'], img_size=img_size)
            else:
                x = conv_block(x, params[i], int(mdef['size']), int(mdef['stride']),
                               mdef['activation'])
        elif t == 'maxpool':
            x = maxpool_2x2_s1(x)
        elif t == 'upsample':
            x = upsample_nearest(x, int(mdef['stride']))
        elif t == 'route':
            layers = [int(l) for l in mdef['layers'].split(',')]
            combined = jnp.concatenate([layer_outputs[l] for l in layers], axis=0)
            gsize = combined.shape[0] // int(mdef.get('groups', 1))
            gid = int(mdef.get('group_id', 0))
            x = combined[gsize * gid:gsize * (gid + 1)]
        elif t == 'shortcut':
            x = layer_outputs[-1] + layer_outputs[int(mdef['from'])]
        elif t == 'yolo':
            if not _is_fused_head(i - 1, module_defs, referenced):
                x = yolo_layer(x, img_size, params[i]['anchors'])
            # else: x already holds the decoded (B, na*ny*nx, no) output
            yolo_outputs.append(x)
        layer_outputs.append(x)
    return jnp.concatenate(yolo_outputs, axis=1)  # (bs, total_anchors, num_classes+5)


# ----------------------------------------------------------------------------
# Post-processing (NMS) on host in NumPy — semantics match non_max_suppression.
# TODO(synk): NMS is data-dependent control flow with dynamic output shapes;
#             it has no clean Pallas equivalent, so it runs on host in NumPy.
# ----------------------------------------------------------------------------
def _xywh2xyxy_np(x):
    y = np.empty_like(x)
    y[..., 0] = x[..., 0] - x[..., 2] / 2
    y[..., 1] = x[..., 1] - x[..., 3] / 2
    y[..., 2] = x[..., 0] + x[..., 2] / 2
    y[..., 3] = x[..., 1] + x[..., 3] / 2
    return y


def _greedy_nms(boxes, scores, iou_thres):
    order = np.argsort(-scores)
    keep = []
    while order.size > 0:
        i = order[0]
        keep.append(i)
        if order.size == 1:
            break
        rest = order[1:]
        xx1 = np.maximum(boxes[i, 0], boxes[rest, 0])
        yy1 = np.maximum(boxes[i, 1], boxes[rest, 1])
        xx2 = np.minimum(boxes[i, 2], boxes[rest, 2])
        yy2 = np.minimum(boxes[i, 3], boxes[rest, 3])
        inter = np.clip(xx2 - xx1, 0, None) * np.clip(yy2 - yy1, 0, None)
        area_i = (boxes[i, 2] - boxes[i, 0]) * (boxes[i, 3] - boxes[i, 1])
        area_r = (boxes[rest, 2] - boxes[rest, 0]) * (boxes[rest, 3] - boxes[rest, 1])
        iou = inter / (area_i + area_r - inter + 1e-9)
        order = rest[iou <= iou_thres]
    return np.array(keep, dtype=np.int64)


def non_max_suppression_np(prediction, conf_thres=0.5, iou_thres=0.9):
    nc = prediction.shape[2] - 5
    max_wh, max_det, max_nms = 4096, 300, 30000
    multi_label = nc > 1
    output = [np.zeros((0, 6), dtype=np.float32)] * prediction.shape[0]
    for xi, x in enumerate(prediction):
        x = x[x[:, 4] > conf_thres]
        if not x.shape[0]:
            continue
        x = x.copy()
        x[:, 5:] *= x[:, 4:5]
        box = _xywh2xyxy_np(x[:, :4])
        if multi_label:
            i, j = np.nonzero(x[:, 5:] > conf_thres)
            x = np.concatenate(
                (box[i], x[i, j + 5, None], j[:, None].astype(np.float32)), 1)
        else:
            j = x[:, 5:].argmax(1, keepdims=True)
            conf = np.take_along_axis(x[:, 5:], j, 1)
            x = np.concatenate((box, conf, j.astype(np.float32)), 1)[conf.reshape(-1) > conf_thres]
        n = x.shape[0]
        if not n:
            continue
        if n > max_nms:
            x = x[np.argsort(-x[:, 4])[:max_nms]]
        c = x[:, 5:6] * max_wh
        boxes, scores = x[:, :4] + c, x[:, 4]
        keep = _greedy_nms(boxes, scores, iou_thres)
        if keep.shape[0] > max_det:
            keep = keep[:max_det]
        output[xi] = x[keep]
    return output


def postprocess(pred_np):
    pred_batch = non_max_suppression_np(pred_np, conf_thres=0.5, iou_thres=0.9)
    batched_out = []
    for p in pred_batch:
        if p.shape[0]:
            d = {'boxes': p[:, :4].copy(),
                 'scores': p[:, 4].copy(),
                 'labels': p[:, 5].astype(np.int32)}
        else:
            d = {'boxes': np.array([], dtype=np.float32),
                 'scores': np.array([], dtype=np.float32),
                 'labels': np.array([], dtype=np.float32)}
        batched_out.append(d)
    return batched_out


if __name__ == "__main__":
    key_x = jax.random.PRNGKey(0)
    x = jax.random.normal(key_x, (BATCH, IN_CHANNELS, IMG_SIZE, IMG_SIZE), jnp.float32)

    params = build_params(MODULE_DEFS, IN_CHANNELS, jax.random.PRNGKey(1))

    # Whole network forward compiled into a single XLA program (params closed
    # over as constants; all per-conv glue fuses around the pallas_calls).
    network_fwd = jax.jit(lambda xin: yolov3_network_forward(xin, params, MODULE_DEFS))

    pred = jax.block_until_ready(network_fwd(x))
    pred_np = np.asarray(pred)
    batched_out = postprocess(pred_np)

    # basic sanity: (bs, 3*4*4 + 3*16*16, num_classes+5)
    assert pred.shape == (BATCH, 3 * 4 * 4 + 3 * 16 * 16, 8), pred.shape
    assert len(batched_out) == BATCH
    assert np.all(np.isfinite(pred_np))

    print("KERNEL_OK")
</pallas_src>

<mosaic_0001>
module attributes {stable_mosaic.version = 11 : i64} {
  func.func @_conv_leaky_kernel(%arg0: i32, %arg1: memref<16x128xbf16, #tpu.memory_space<vmem>>, %arg2: memref<128x512xbf16, #tpu.memory_space<vmem>>, %arg3: memref<16x512xbf16, #tpu.memory_space<vmem>>) attributes {dimension_semantics = [#tpu.dimension_semantics<parallel>], iteration_bounds = array<i64: 1>, scalar_prefetch = 0 : i64, scratch_operands = 0 : i64, tpu.core_type = #tpu.core_type<tc>, window_params = [{pipeline_mode = #tpu.pipeline_mode<synchronous>, transform_indices = @transform_0, window_bounds = array<i64: 16, 128>}, {transform_indices = @transform_1, window_bounds = array<i64: 128, 512>}, {transform_indices = @transform_2, window_bounds = array<i64: 16, 512>}]} {
    %c0 = arith.constant 0 : index
    %c0_0 = arith.constant 0 : index
    %0 = vector.load %arg1[%c0, %c0_0] : memref<16x128xbf16, #tpu.memory_space<vmem>>, vector<16x128xbf16>
    %c0_1 = arith.constant 0 : index
    %c0_2 = arith.constant 0 : index
    %1 = vector.load %arg2[%c0_1, %c0_2] : memref<128x512xbf16, #tpu.memory_space<vmem>>, vector<128x512xbf16>
    %cst = arith.constant dense<0.000000e+00> : vector<16x512xf32>
    %2 = tpu.matmul %0, %1, %cst {dimension_numbers = #tpu.dot_dimension_numbers<[1], [0], [0], [1], [0, 0, 1, 1], [], []>} : vector<16x128xbf16>, vector<128x512xbf16>, vector<16x512xf32> -> vector<16x512xf32>
    %cst_3 = arith.constant 1.000000e-01 : f32
    %3 = vector.broadcast %cst_3 : f32 to vector<16x512xf32>
    %4 = arith.mulf %3, %2 : vector<16x512xf32>
    %5 = arith.maximumf %2, %4 : vector<16x512xf32>
    %6 = arith.truncf %5 : vector<16x512xf32> to vector<16x512xbf16>
    %c0_4 = arith.constant 0 : index
    %c0_5 = arith.constant 0 : index
    %7 = vector.load %arg3[%c0_4, %c0_5] : memref<16x512xbf16, #tpu.memory_space<vmem>>, vector<16x512xbf16>
    tpu.vector_store %arg3[%c0_4, %c0_5], %6 {strides = array<i32>} : memref<16x512xbf16, #tpu.memory_space<vmem>>, vector<16x512xbf16>,
    return
  }
  func.func @transform_0(%arg0: i32) -> (i32, i32) {
    %c0_i32 = arith.constant 0 : i32
    %c0_i32_0 = arith.constant 0 : i32
    %c0_i32_1 = arith.constant 0 : i32
    return %c0_i32, %c0_i32_0 : i32, i32
  }
  func.func @transform_1(%arg0: i32) -> (i32, i32) {
    %c0_i32 = arith.constant 0 : i32
    %c0_i32_0 = arith.constant 0 : i32
    return %c0_i32, %arg0 : i32, i32
  }
  func.func @transform_2(%arg0: i32) -> (i32, i32) {
    %c0_i32 = arith.constant 0 : i32
    %c0_i32_0 = arith.constant 0 : i32
    return %c0_i32, %arg0 : i32, i32
  }
}

module attributes {stable_mosaic.version = 11 : i64} {
  func.func @_conv_leaky_kernel(%arg0: i32, %arg1: memref<16x128xbf16, #tpu.memory_space<vmem>>, %arg2: memref<128x128xbf16, #tpu.memory_space<vmem>>, %arg3: memref<16x128xbf16, #tpu.memory_space<vmem>>) attributes {dimension_semantics = [#tpu.dimension_semantics<parallel>], iteration_bounds = array<i64: 1>, scalar_prefetch = 0 : i64, scratch_operands = 0 : i64, tpu.core_type = #tpu.core_type<tc>, window_params = [{pipeline_mode = #tpu.pipeline_mode<synchronous>, transform_indices = @transform_0, window_bounds = array<i64: 16, 128>}, {transform_indices = @transform_1, window_bounds = array<i64: 128, 128>}, {transform_indices = @transform_2, window_bounds = array<i64: 16, 128>}]} {
    %c0 = arith.constant 0 : index
    %c0_0 = arith.constant 0 : index
    %0 = vector.load %arg1[%c0, %c0_0] : memref<16x128xbf16, #tpu.memory_space<vmem>>, vector<16x128xbf16>
    %c0_1 = arith.constant 0 : index
    %c0_2 = arith.constant 0 : index
    %1 = vector.load %arg2[%c0_1, %c0_2] : memref<128x128xbf16, #tpu.memory_space<vmem>>, vector<128x128xbf16>
    %cst = arith.constant dense<0.000000e+00> : vector<16x128xf32>
    %2 = tpu.matmul %0, %1, %cst {dimension_numbers = #tpu.dot_dimension_numbers<[1], [0], [0], [1], [0, 0, 1, 1], [], []>} : vector<16x128xbf16>, vector<128x128xbf16>, vector<16x128xf32> -> vector<16x128xf32>
    %cst_3 = arith.constant 1.000000e-01 : f32
    %3 = vector.broadcast %cst_3 : f32 to vector<16x128xf32>
    %4 = arith.mulf %3, %2 : vector<16x128xf32>
    %5 = arith.maximumf %2, %4 : vector<16x128xf32>
    %6 = arith.truncf %5 : vector<16x128xf32> to vector<16x128xbf16>
    %c0_4 = arith.constant 0 : index
    %c0_5 = arith.constant 0 : index
    %7 = vector.load %arg3[%c0_4, %c0_5] : memref<16x128xbf16, #tpu.memory_space<vmem>>, vector<16x128xbf16>
    tpu.vector_store %arg3[%c0_4, %c0_5], %6 {strides = array<i32>} : memref<16x128xbf16, #tpu.memory_space<vmem>>, vector<16x128xbf16>,
    return
  }
  func.func @transform_0(%arg0: i32) -> (i32, i32) {
    %c0_i32 = arith.constant 0 : i32
    %c0_i32_0 = arith.constant 0 : i32
    %c0_i32_1 = arith.constant 0 : i32
    return %c0_i32, %c0_i32_0 : i32, i32
  }
  func.func @transform_1(%arg0: i32) -> (i32, i32) {
    %c0_i32 = arith.constant 0 : i32
    %c0_i32_0 = arith.constant 0 : i32
    return %c0_i32, %arg0 : i32, i32
  }
  func.func @transform_2(%arg0: i32) -> (i32, i32) {
    %c0_i32 = arith.constant 0 : i32
    %c0_i32_0 = arith.constant 0 : i32
    return %c0_i32, %arg0 : i32, i32
  }
}

module attributes {stable_mosaic.version = 11 : i64} {
  func.func @_conv_yolo_kernel(%arg0: i32, %arg1: memref<32x128xbf16, #tpu.memory_space<vmem>>, %arg2: memref<128x512xbf16, #tpu.memory_space<vmem>>, %arg3: memref<32x512xf32, #tpu.memory_space<vmem>>) attributes {dimension_semantics = [#tpu.dimension_semantics<parallel>], iteration_bounds = array<i64: 1>, scalar_prefetch = 0 : i64, scratch_operands = 0 : i64, tpu.core_type = #tpu.core_type<tc>, window_params = [{pipeline_mode = #tpu.pipeline_mode<synchronous>, transform_indices = @transform_0, window_bounds = array<i64: 32, 128>}, {transform_indices = @transform_1, window_bounds = array<i64: 128, 512>}, {transform_indices = @transform_2, window_bounds = array<i64: 32, 512>}]} {
    %c0 = arith.constant 0 : index
    %c0_0 = arith.constant 0 : index
    %0 = vector.load %arg1[%c0, %c0_0] : memref<32x128xbf16, #tpu.memory_space<vmem>>, vector<32x128xbf16>
    %c0_1 = arith.constant 0 : index
    %c0_2 = arith.constant 0 : index
    %1 = vector.load %arg2[%c0_1, %c0_2] : memref<128x512xbf16, #tpu.memory_space<vmem>>, vector<128x512xbf16>
    %cst = arith.constant dense<0.000000e+00> : vector<32x512xf32>
    %2 = tpu.matmul %0, %1, %cst {dimension_numbers = #tpu.dot_dimension_numbers<[1], [0], [0], [1], [0, 0, 1, 1], [], []>} : vector<32x128xbf16>, vector<128x512xbf16>, vector<32x512xf32> -> vector<32x512xf32>
    %c512_i32 = arith.constant 512 : i32
    %3 = arith.muli %arg0, %c512_i32 : i32
    %4 = tpu.iota {dimensions = array<i32: 0>} : vector<32x1xi32>
    %5 = tpu.iota {dimensions = array<i32: 1>} : vector<1x512xi32>
    %6 = vector.broadcast %3 : i32 to vector<1x512xi32>
    %7 = arith.addi %5, %6 : vector<1x512xi32>
    %c7_i32 = arith.constant 7 : i32
    %8 = vector.broadcast %c7_i32 : i32 to vector<32x1xi32>
    %9 = arith.andi %4, %8 : vector<32x1xi32>
    %c3_i32 = arith.constant 3 : i32
    %10 = vector.broadcast %c3_i32 : i32 to vector<32x1xi32>
    %11 = arith.shrsi %4, %10 : vector<32x1xi32>
    %c15_i32 = arith.constant 15 : i32
    %12 = vector.broadcast %c15_i32 : i32 to vector<1x512xi32>
    %13 = arith.andi %7, %12 : vector<1x512xi32>
    %c4_i32 = arith.constant 4 : i32
    %14 = vector.broadcast %c4_i32 : i32 to vector<1x512xi32>
    %15 = arith.shrsi %7, %14 : vector<1x512xi32>
    %c15_i32_3 = arith.constant 15 : i32
    %16 = vector.broadcast %c15_i32_3 : i32 to vector<1x512xi32>
    %17 = arith.andi %15, %16 : vector<1x512xi32>
    %18 = arith.sitofp %13 : vector<1x512xi32> to vector<1x512xf32>
    %19 = arith.sitofp %17 : vector<1x512xi32> to vector<1x512xf32>
    %cst_4 = arith.constant 1.200000e+01 : f32
    %20 = vector.broadcast %cst_4 : f32 to vector<32x1xf32>
    %cst_5 = arith.constant 1.400000e+01 : f32
    %21 = vector.broadcast %cst_5 : f32 to vector<32x1xf32>
    %c1_i32 = arith.constant 1 : i32
    %22 = vector.broadcast %c1_i32 : i32 to vector<32x1xi32>
    %23 = arith.cmpi eq, %11, %22 : vector<32x1xi32>
    %cst_6 = arith.constant 1.000000e+01 : f32
    %24 = vector.broadcast %cst_6 : f32 to vector<32x1xf32>
    %25 = arith.select %23, %24, %20 : vector<32x1xi1>, vector<32x1xf32>
    %c1_i32_7 = arith.constant 1 : i32
    %26 = vector.broadcast %c1_i32_7 : i32 to vector<32x1xi32>
    %27 = arith.cmpi eq, %11, %26 : vector<32x1xi32>
    %cst_8 = arith.constant 1.200000e+01 : f32
    %28 = vector.broadcast %cst_8 : f32 to vector<32x1xf32>
    %29 = arith.select %27, %28, %21 : vector<32x1xi1>, vector<32x1xf32>
    %c0_i32 = arith.constant 0 : i32
    %30 = vector.broadcast %c0_i32 : i32 to vector<32x1xi32>
    %31 = arith.cmpi eq, %11, %30 : vector<32x1xi32>
    %cst_9 = arith.constant 8.000000e+00 : f32
    %32 = vector.broadcast %cst_9 : f32 to vector<32x1xf32>
    %33 = arith.select %31, %32, %25 : vector<32x1xi1>, vector<32x1xf32>
    %c0_i32_10 = arith.constant 0 : i32
    %34 = vector.broadcast %c0_i32_10 : i32 to vector<32x1xi32>
    %35 = arith.cmpi eq, %11, %34 : vector<32x1xi32>
    %cst_11 = arith.constant 1.000000e+01 : f32
    %36 = vector.broadcast %cst_11 : f32 to vector<32x1xf32>
    %37 = arith.select %35, %36, %29 : vector<32x1xi1>, vector<32x1xf32>
    %c0_i32_12 = arith.constant 0 : i32
    %38 = vector.broadcast %c0_i32_12 : i32 to vector<32x1xi32>
    %39 = arith.cmpi eq, %9, %38 : vector<32x1xi32>
    %40 = vector.shape_cast %39 : vector<32x1xi1> to vector<32x1xi1>
    %41 = vector.broadcast %40 : vector<32x1xi1> to vector<32x512xi1>
    %42 = vector.shape_cast %18 : vector<1x512xf32> to vector<1x512xf32>
    %43 = vector.broadcast %42 : vector<1x512xf32> to vector<32x512xf32>
    %44 = vector.shape_cast %19 : vector<1x512xf32> to vector<1x512xf32>
    %45 = vector.broadcast %44 : vector<1x512xf32> to vector<32x512xf32>
    %46 = arith.select %41, %43, %45 : vector<32x512xi1>, vector<32x512xf32>
    %c2_i32 = arith.constant 2 : i32
    %47 = vector.broadcast %c2_i32 : i32 to vector<32x1xi32>
    %48 = arith.cmpi eq, %9, %47 : vector<32x1xi32>
    %49 = arith.select %48, %33, %37 : vector<32x1xi1>, vector<32x1xf32>
    %50 = math.exp %2 : vector<32x512xf32>
    %cst_13 = arith.constant 2.000000e+01 : f32
    %51 = vector.broadcast %cst_13 : f32 to vector<32x512xf32>
    %52 = arith.cmpf ogt, %2, %51 : vector<32x512xf32>
    %cst_14 = arith.constant 1.000000e+00 : f32
    %53 = vector.broadcast %cst_14 : f32 to vector<32x512xf32>
    %54 = arith.addf %53, %50 : vector<32x512xf32>
    %55 = arith.divf %50, %54 : vector<32x512xf32>
    %cst_15 = arith.constant 1.000000e+00 : f32
    %56 = vector.broadcast %cst_15 : f32 to vector<32x512xf32>
    %57 = arith.select %52, %56, %55 : vector<32x512xi1>, vector<32x512xf32>
    %58 = arith.addf %57, %46 : vector<32x512xf32>
    %cst_16 = arith.constant 1.000000e+00 : f32
    %59 = vector.broadcast %cst_16 : f32 to vector<32x512xf32>
    %60 = arith.mulf %58, %59 : vector<32x512xf32>
    %61 = vector.broadcast %49 : vector<32x1xf32> to vector<32x512xf32>
    %62 = arith.mulf %50, %61 : vector<32x512xf32>
    %c2_i32_17 = arith.constant 2 : i32
    %63 = vector.broadcast %c2_i32_17 : i32 to vector<32x1xi32>
    %64 = arith.cmpi slt, %9, %63 : vector<32x1xi32>
    %c4_i32_18 = arith.constant 4 : i32
    %65 = vector.broadcast %c4_i32_18 : i32 to vector<32x1xi32>
    %66 = arith.cmpi slt, %9, %65 : vector<32x1xi32>
    %67 = vector.shape_cast %66 : vector<32x1xi1> to vector<32x1xi1>
    %68 = vector.broadcast %67 : vector<32x1xi1> to vector<32x512xi1>
    %69 = arith.select %68, %62, %57 : vector<32x512xi1>, vector<32x512xf32>
    %70 = vector.shape_cast %64 : vector<32x1xi1> to vector<32x1xi1>
    %71 = vector.broadcast %70 : vector<32x1xi1> to vector<32x512xi1>
    %72 = arith.select %71, %60, %69 : vector<32x512xi1>, vector<32x512xf32>
    %c0_19 = arith.constant 0 : index
    %c0_20 = arith.constant 0 : index
    %73 = vector.load %arg3[%c0_19, %c0_20] : memref<32x512xf32, #tpu.memory_space<vmem>>, vector<32x512xf32>
    tpu.vector_store %arg3[%c0_19, %c0_20], %72 {strides = array<i32>} : memref<32x512xf32, #tpu.memory_space<vmem>>, vector<32x512xf32>,
    return
  }
  func.func @transform_0(%arg0: i32) -> (i32, i32) {
    %c0_i32 = arith.constant 0 : i32
    %c0_i32_0 = arith.constant 0 : i32
    %c0_i32_1 = arith.constant 0 : i32
    return %c0_i32, %c0_i32_0 : i32, i32
  }
  func.func @transform_1(%arg0: i32) -> (i32, i32) {
    %c0_i32 = arith.constant 0 : i32
    %c0_i32_0 = arith.constant 0 : i32
    return %c0_i32, %arg0 : i32, i32
  }
  func.func @transform_2(%arg0: i32) -> (i32, i32) {
    %c0_i32 = arith.constant 0 : i32
    %c0_i32_0 = arith.constant 0 : i32
    return %c0_i32, %arg0 : i32, i32
  }
}

module attributes {stable_mosaic.version = 11 : i64} {
  func.func @_conv_leaky_kernel(%arg0: i32, %arg1: memref<32x256xbf16, #tpu.memory_space<vmem>>, %arg2: memref<256x128xbf16, #tpu.memory_space<vmem>>, %arg3: memref<32x128xbf16, #tpu.memory_space<vmem>>) attributes {dimension_semantics = [#tpu.dimension_semantics<parallel>], iteration_bounds = array<i64: 1>, scalar_prefetch = 0 : i64, scratch_operands = 0 : i64, tpu.core_type = #tpu.core_type<tc>, window_params = [{pipeline_mode = #tpu.pipeline_mode<synchronous>, transform_indices = @transform_0, window_bounds = array<i64: 32, 256>}, {transform_indices = @transform_1, window_bounds = array<i64: 256, 128>}, {transform_indices = @transform_2, window_bounds = array<i64: 32, 128>}]} {
    %c0 = arith.constant 0 : index
    %c0_0 = arith.constant 0 : index
    %0 = vector.load %arg1[%c0, %c0_0] : memref<32x256xbf16, #tpu.memory_space<vmem>>, vector<32x256xbf16>
    %c0_1 = arith.constant 0 : index
    %c0_2 = arith.constant 0 : index
    %1 = vector.load %arg2[%c0_1, %c0_2] : memref<256x128xbf16, #tpu.memory_space<vmem>>, vector<256x128xbf16>
    %cst = arith.constant dense<0.000000e+00> : vector<32x128xf32>
    %2 = tpu.matmul %0, %1, %cst {dimension_numbers = #tpu.dot_dimension_numbers<[1], [0], [0], [1], [0, 0, 1, 1], [], []>} : vector<32x256xbf16>, vector<256x128xbf16>, vector<32x128xf32> -> vector<32x128xf32>
    %cst_3 = arith.constant 1.000000e-01 : f32
    %3 = vector.broadcast %cst_3 : f32 to vector<32x128xf32>
    %4 = arith.mulf %3, %2 : vector<32x128xf32>
    %5 = arith.maximumf %2, %4 : vector<32x128xf32>
    %6 = arith.truncf %5 : vector<32x128xf32> to vector<32x128xbf16>
    %c0_4 = arith.constant 0 : index
    %c0_5 = arith.constant 0 : index
    %7 = vector.load %arg3[%c0_4, %c0_5] : memref<32x128xbf16, #tpu.memory_space<vmem>>, vector<32x128xbf16>
    tpu.vector_store %arg3[%c0_4, %c0_5], %6 {strides = array<i32>} : memref<32x128xbf16, #tpu.memory_space<vmem>>, vector<32x128xbf16>,
    return
  }
  func.func @transform_0(%arg0: i32) -> (i32, i32) {
    %c0_i32 = arith.constant 0 : i32
    %c0_i32_0 = arith.constant 0 : i32
    %c0_i32_1 = arith.constant 0 : i32
    return %c0_i32, %c0_i32_0 : i32, i32
  }
  func.func @transform_1(%arg0: i32) -> (i32, i32) {
    %c0_i32 = arith.constant 0 : i32
    %c0_i32_0 = arith.constant 0 : i32
    return %c0_i32, %arg0 : i32, i32
  }
  func.func @transform_2(%arg0: i32) -> (i32, i32) {
    %c0_i32 = arith.constant 0 : i32
    %c0_i32_0 = arith.constant 0 : i32
    return %c0_i32, %arg0 : i32, i32
  }
}

module attributes {stable_mosaic.version = 11 : i64} {
  func.func @_conv_yolo_kernel(%arg0: i32, %arg1: memref<32x128xbf16, #tpu.memory_space<vmem>>, %arg2: memref<128x128xbf16, #tpu.memory_space<vmem>>, %arg3: memref<32x128xf32, #tpu.memory_space<vmem>>) attributes {dimension_semantics = [#tpu.dimension_semantics<parallel>], iteration_bounds = array<i64: 1>, scalar_prefetch = 0 : i64, scratch_operands = 0 : i64, tpu.core_type = #tpu.core_type<tc>, window_params = [{pipeline_mode = #tpu.pipeline_mode<synchronous>, transform_indices = @transform_0, window_bounds = array<i64: 32, 128>}, {transform_indices = @transform_1, window_bounds = array<i64: 128, 128>}, {transform_indices = @transform_2, window_bounds = array<i64: 32, 128>}]} {
    %c0 = arith.constant 0 : index
    %c0_0 = arith.constant 0 : index
    %0 = vector.load %arg1[%c0, %c0_0] : memref<32x128xbf16, #tpu.memory_space<vmem>>, vector<32x128xbf16>
    %c0_1 = arith.constant 0 : index
    %c0_2 = arith.constant 0 : index
    %1 = vector.load %arg2[%c0_1, %c0_2] : memref<128x128xbf16, #tpu.memory_space<vmem>>, vector<128x128xbf16>
    %cst = arith.constant dense<0.000000e+00> : vector<32x128xf32>
    %2 = tpu.matmul %0, %1, %cst {dimension_numbers = #tpu.dot_dimension_numbers<[1], [0], [0], [1], [0, 0, 1, 1], [], []>} : vector<32x128xbf16>, vector<128x128xbf16>, vector<32x128xf32> -> vector<32x128xf32>
    %c128_i32 = arith.constant 128 : i32
    %3 = arith.muli %arg0, %c128_i32 : i32
    %4 = tpu.iota {dimensions = array<i32: 0>} : vector<32x1xi32>
    %5 = tpu.iota {dimensions = array<i32: 1>} : vector<1x128xi32>
    %6 = vector.broadcast %3 : i32 to vector<1x128xi32>
    %7 = arith.addi %5, %6 : vector<1x128xi32>
    %c7_i32 = arith.constant 7 : i32
    %8 = vector.broadcast %c7_i32 : i32 to vector<32x1xi32>
    %9 = arith.andi %4, %8 : vector<32x1xi32>
    %c3_i32 = arith.constant 3 : i32
    %10 = vector.broadcast %c3_i32 : i32 to vector<32x1xi32>
    %11 = arith.shrsi %4, %10 : vector<32x1xi32>
    %c3_i32_3 = arith.constant 3 : i32
    %12 = vector.broadcast %c3_i32_3 : i32 to vector<1x128xi32>
    %13 = arith.andi %7, %12 : vector<1x128xi32>
    %c2_i32 = arith.constant 2 : i32
    %14 = vector.broadcast %c2_i32 : i32 to vector<1x128xi32>
    %15 = arith.shrsi %7, %14 : vector<1x128xi32>
    %c3_i32_4 = arith.constant 3 : i32
    %16 = vector.broadcast %c3_i32_4 : i32 to vector<1x128xi32>
    %17 = arith.andi %15, %16 : vector<1x128xi32>
    %18 = arith.sitofp %13 : vector<1x128xi32> to vector<1x128xf32>
    %19 = arith.sitofp %17 : vector<1x128xi32> to vector<1x128xf32>
    %cst_5 = arith.constant 6.000000e+00 : f32
    %20 = vector.broadcast %cst_5 : f32 to vector<32x1xf32>
    %cst_6 = arith.constant 8.000000e+00 : f32
    %21 = vector.broadcast %cst_6 : f32 to vector<32x1xf32>
    %c1_i32 = arith.constant 1 : i32
    %22 = vector.broadcast %c1_i32 : i32 to vector<32x1xi32>
    %23 = arith.cmpi eq, %11, %22 : vector<32x1xi32>
    %cst_7 = arith.constant 4.000000e+00 : f32
    %24 = vector.broadcast %cst_7 : f32 to vector<32x1xf32>
    %25 = arith.select %23, %24, %20 : vector<32x1xi1>, vector<32x1xf32>
    %c1_i32_8 = arith.constant 1 : i32
    %26 = vector.broadcast %c1_i32_8 : i32 to vector<32x1xi32>
    %27 = arith.cmpi eq, %11, %26 : vector<32x1xi32>
    %cst_9 = arith.constant 5.000000e+00 : f32
    %28 = vector.broadcast %cst_9 : f32 to vector<32x1xf32>
    %29 = arith.select %27, %28, %21 : vector<32x1xi1>, vector<32x1xf32>
    %c0_i32 = arith.constant 0 : i32
    %30 = vector.broadcast %c0_i32 : i32 to vector<32x1xi32>
    %31 = arith.cmpi eq, %11, %30 : vector<32x1xi32>
    %cst_10 = arith.constant 2.000000e+00 : f32
    %32 = vector.broadcast %cst_10 : f32 to vector<32x1xf32>
    %33 = arith.select %31, %32, %25 : vector<32x1xi1>, vector<32x1xf32>
    %c0_i32_11 = arith.constant 0 : i32
    %34 = vector.broadcast %c0_i32_11 : i32 to vector<32x1xi32>
    %35 = arith.cmpi eq, %11, %34 : vector<32x1xi32>
    %cst_12 = arith.constant 3.000000e+00 : f32
    %36 = vector.broadcast %cst_12 : f32 to vector<32x1xf32>
    %37 = arith.select %35, %36, %29 : vector<32x1xi1>, vector<32x1xf32>
    %c0_i32_13 = arith.constant 0 : i32
    %38 = vector.broadcast %c0_i32_13 : i32 to vector<32x1xi32>
    %39 = arith.cmpi eq, %9, %38 : vector<32x1xi32>
    %40 = vector.shape_cast %39 : vector<32x1xi1> to vector<32x1xi1>
    %41 = vector.broadcast %40 : vector<32x1xi1> to vector<32x128xi1>
    %42 = vector.shape_cast %18 : vector<1x128xf32> to vector<1x128xf32>
    %43 = vector.broadcast %42 : vector<1x128xf32> to vector<32x128xf32>
    %44 = vector.shape_cast %19 : vector<1x128xf32> to vector<1x128xf32>
    %45 = vector.broadcast %44 : vector<1x128xf32> to vector<32x128xf32>
    %46 = arith.select %41, %43, %45 : vector<32x128xi1>, vector<32x128xf32>
    %c2_i32_14 = arith.constant 2 : i32
    %47 = vector.broadcast %c2_i32_14 : i32 to vector<32x1xi32>
    %48 = arith.cmpi eq, %9, %47 : vector<32x1xi32>
    %49 = arith.select %48, %33, %37 : vector<32x1xi1>, vector<32x1xf32>
    %50 = math.exp %2 : vector<32x128xf32>
    %cst_15 = arith.constant 2.000000e+01 : f32
    %51 = vector.broadcast %cst_15 : f32 to vector<32x128xf32>
    %52 = arith.cmpf ogt, %2, %51 : vector<32x128xf32>
    %cst_16 = arith.constant 1.000000e+00 : f32
    %53 = vector.broadcast %cst_16 : f32 to vector<32x128xf32>
    %54 = arith.addf %53, %50 : vector<32x128xf32>
    %55 = arith.divf %50, %54 : vector<32x128xf32>
    %cst_17 = arith.constant 1.000000e+00 : f32
    %56 = vector.broadcast %cst_17 : f32 to vector<32x128xf32>
    %57 = arith.select %52, %56, %55 : vector<32x128xi1>, vector<32x128xf32>
    %58 = arith.addf %57, %46 : vector<32x128xf32>
    %cst_18 = arith.constant 4.000000e+00 : f32
    %59 = vector.broadcast %cst_18 : f32 to vector<32x128xf32>
    %60 = arith.mulf %58, %59 : vector<32x128xf32>
    %61 = vector.broadcast %49 : vector<32x1xf32> to vector<32x128xf32>
    %62 = arith.mulf %50, %61 : vector<32x128xf32>
    %c2_i32_19 = arith.constant 2 : i32
    %63 = vector.broadcast %c2_i32_19 : i32 to vector<32x1xi32>
    %64 = arith.cmpi slt, %9, %63 : vector<32x1xi32>
    %c4_i32 = arith.constant 4 : i32
    %65 = vector.broadcast %c4_i32 : i32 to vector<32x1xi32>
    %66 = arith.cmpi slt, %9, %65 : vector<32x1xi32>
    %67 = vector.shape_cast %66 : vector<32x1xi1> to vector<32x1xi1>
    %68 = vector.broadcast %67 : vector<32x1xi1> to vector<32x128xi1>
    %69 = arith.select %68, %62, %57 : vector<32x128xi1>, vector<32x128xf32>
    %70 = vector.shape_cast %64 : vector<32x1xi1> to vector<32x1xi1>
    %71 = vector.broadcast %70 : vector<32x1xi1> to vector<32x128xi1>
    %72 = arith.select %71, %60, %69 : vector<32x128xi1>, vector<32x128xf32>
    %c0_20 = arith.constant 0 : index
    %c0_21 = arith.constant 0 : index
    %73 = vector.load %arg3[%c0_20, %c0_21] : memref<32x128xf32, #tpu.memory_space<vmem>>, vector<32x128xf32>
    tpu.vector_store %arg3[%c0_20, %c0_21], %72 {strides = array<i32>} : memref<32x128xf32, #tpu.memory_space<vmem>>, vector<32x128xf32>,
    return
  }
  func.func @transform_0(%arg0: i32) -> (i32, i32) {
    %c0_i32 = arith.constant 0 : i32
    %c0_i32_0 = arith.constant 0 : i32
    %c0_i32_1 = arith.constant 0 : i32
    return %c0_i32, %c0_i32_0 : i32, i32
  }
  func.func @transform_1(%arg0: i32) -> (i32, i32) {
    %c0_i32 = arith.constant 0 : i32
    %c0_i32_0 = arith.constant 0 : i32
    return %c0_i32, %arg0 : i32, i32
  }
  func.func @transform_2(%arg0: i32) -> (i32, i32) {
    %c0_i32 = arith.constant 0 : i32
    %c0_i32_0 = arith.constant 0 : i32
    return %c0_i32, %arg0 : i32, i32
  }
}

</mosaic_0001>

<llo_original>
// kernel: _lambda_.8
$region0: #{_lambda_.8}
  #allocation0 [shape = 'u32[]', space=smem, size = 0x4, offset = 0x4, fixed_abs, tag = 'smem constant byte address 0x4 - core index']
  #allocation1 [shape = 'u32[144,128]{1,0:T(1,128)}', space=vmem, size = 0x12000, scoped, tag = 'internal scratch']
  %s0 = inlined_call_operand.vmem [shape: bf16[16,128], index: 0, kind: input, shape index: {}]
  %s1 = inlined_call_operand.vmem [shape: bf16[128,512], index: 1, kind: input, shape index: {}]
  %s2 = inlined_call_operand.vmem [shape: bf16[16,512], index: 2, kind: output, shape index: {}]
  %s3 = sld [smem:[#allocation0]]
  $region18: #{_lambda_.8} parent=0
    _
  %s5 = ssub.s32 1, %s3
  %s6 = scalar_select 0, %s5, %s3
  // Predicated region
  $region2: #{_lambda_.8} parent=0 // pred_check
    _
  $region3: #{_lambda_.8} parent=0 // pred_check_branch
    %8 = sbr.rel (0) target = $region5
  $region4: #{_lambda_.8} parent=0 // pred_region
    _
  $region5: #{_lambda_.8} parent=0 // pred_fallthru
    _
  // Predicated region
  $region6: #{_lambda_.8} parent=0 // pred_check
    _
  $region7: #{_lambda_.8} parent=0 // pred_check_branch
    %10 = sbr.rel (0) target = $region9
  $region8: #{_lambda_.8} parent=0 // pred_region
    _
  $region9: #{_lambda_.8} parent=0 // pred_fallthru
    _
  %v12 = vld [vmem:[%s0] sm:$0xf]
  %v13 = vld [vmem:[%s0 + $0x4] sm:$0xf]
  %v14 = vld [vmem:[%s1] sm:$0xff]
  %v15 = vld [vmem:[%s1 + $0x8] sm:$0xff]
  %v16 = vld [vmem:[%s1 + $0x10] sm:$0xff]
  %v17 = vld [vmem:[%s1 + $0x18] sm:$0xff]
  %v18 = vld [vmem:[%s1 + $0x20] sm:$0xff]
  %v19 = vld [vmem:[%s1 + $0x28] sm:$0xff]
  %v20 = vld [vmem:[%s1 + $0x30] sm:$0xff]
  %v21 = vld [vmem:[%s1 + $0x38] sm:$0xff]
  %v22 = vld [vmem:[%s1 + $0x40] sm:$0xff]
  %v23 = vld [vmem:[%s1 + $0x48] sm:$0xff]
  %v24 = vld [vmem:[%s1 + $0x50] sm:$0xff]
  %v25 = vld [vmem:[%s1 + $0x58] sm:$0xff]
  %v26 = vld [vmem:[%s1 + $0x60] sm:$0xff]
  %v27 = vld [vmem:[%s1 + $0x68] sm:$0xff]
  %v28 = vld [vmem:[%s1 + $0x70] sm:$0xff]
  %v29 = vld [vmem:[%s1 + $0x78] sm:$0xff]
  %v30 = vld [vmem:[%s1 + $0x80] sm:$0xff]
  %v31 = vld [vmem:[%s1 + $0x88] sm:$0xff]
  %v32 = vld [vmem:[%s1 + $0x90] sm:$0xff]
  %v33 = vld [vmem:[%s1 + $0x98] sm:$0xff]
  %v34 = vld [vmem:[%s1 + $0xa0] sm:$0xff]
  %v35 = vld [vmem:[%s1 + $0xa8] sm:$0xff]
  %v36 = vld [vmem:[%s1 + $0xb0] sm:$0xff]
  %v37 = vld [vmem:[%s1 + $0xb8] sm:$0xff]
  %v38 = vld [vmem:[%s1 + $0xc0] sm:$0xff]
  %v39 = vld [vmem:[%s1 + $0xc8] sm:$0xff]
  %v40 = vld [vmem:[%s1 + $0xd0] sm:$0xff]
  %v41 = vld [vmem:[%s1 + $0xd8] sm:$0xff]
  %v42 = vld [vmem:[%s1 + $0xe0] sm:$0xff]
  %v43 = vld [vmem:[%s1 + $0xe8] sm:$0xff]
  %v44 = vld [vmem:[%s1 + $0xf0] sm:$0xff]
  %v45 = vld [vmem:[%s1 + $0xf8] sm:$0xff]
  %v48 = vunpack.c.l.b16 %v12
  %v49 = vunpack.c.l.b16 %v13
  %v50 = vpack.c.b16 %v49, %v48
  %v84 = vunpack.c.l.b16 %v14
  %v85 = vunpack.c.h.b16 %v14
  %v86 = vunpack.c.l.b16 %v15
  %v87 = vunpack.c.h.b16 %v15
  %v88 = vunpack.c.l.b16 %v16
  %v89 = vunpack.c.h.b16 %v16
  %v90 = vunpack.c.l.b16 %v17
  %v91 = vunpack.c.h.b16 %v17
  %v92 = vunpack.c.l.b16 %v18
  %v93 = vunpack.c.h.b16 %v18
  %v94 = vunpack.c.l.b16 %v19
  %v95 = vunpack.c.h.b16 %v19
  %v96 = vunpack.c.l.b16 %v20
  %v97 = vunpack.c.h.b16 %v20
  %v98 = vunpack.c.l.b16 %v21
  %v99 = vunpack.c.h.b16 %v21
  %v100 = vunpack.c.l.b16 %v22
  %v101 = vunpack.c.h.b16 %v22
  %v102 = vunpack.c.l.b16 %v23
  %v103 = vunpack.c.h.b16 %v23
  %v104 = vunpack.c.l.b16 %v24
  %v105 = vunpack.c.h.b16 %v24
  %v106 = vunpack.c.l.b16 %v25
  %v107 = vunpack.c.h.b16 %v25
  %v108 = vunpack.c.l.b16 %v26
  %v109 = vunpack.c.h.b16 %v26
  %v110 = vunpack.c.l.b16 %v27
  %v111 = vunpack.c.h.b16 %v27
  %v112 = vunpack.c.l.b16 %v28
  %v113 = vunpack.c.h.b16 %v28
  %v114 = vunpack.c.l.b16 %v29
  %v115 = vunpack.c.h.b16 %v29
  %v116 = vunpack.c.l.b16 %v30
  %v117 = vunpack.c.h.b16 %v30
  %v118 = vunpack.c.l.b16 %v31
  %v119 = vunpack.c.h.b16 %v31
  %v120 = vunpack.c.l.b16 %v32
  %v121 = vunpack.c.h.b16 %v32
  %v122 = vunpack.c.l.b16 %v33
  %v123 = vunpack.c.h.b16 %v33
  %v124 = vunpack.c.l.b16 %v34
  %v125 = vunpack.c.h.b16 %v34
  %v126 = vunpack.c.l.b16 %v35
  %v127 = vunpack.c.h.b16 %v35
  %v128 = vunpack.c.l.b16 %v36
  %v129 = vunpack.c.h.b16 %v36
  %v130 = vunpack.c.l.b16 %v37
  %v131 = vunpack.c.h.b16 %v37
  %v132 = vunpack.c.l.b16 %v38
  %v133 = vunpack.c.h.b16 %v38
  %v134 = vunpack.c.l.b16 %v39
  %v135 = vunpack.c.h.b16 %v39
  %v136 = vunpack.c.l.b16 %v40
  %v137 = vunpack.c.h.b16 %v40
  %v138 = vunpack.c.l.b16 %v41
  %v139 = vunpack.c.h.b16 %v41
  %v140 = vunpack.c.l.b16 %v42
  %v141 = vunpack.c.h.b16 %v42
  %v142 = vunpack.c.l.b16 %v43
  %v143 = vunpack.c.h.b16 %v43
  %v144 = vunpack.c.l.b16 %v44
  %v145 = vunpack.c.h.b16 %v44
  %v146 = vunpack.c.l.b16 %v45
  %v147 = vunpack.c.h.b16 %v45
  %v148 = vpack.c.b16 %v88, %v84
  %v149 = vpack.c.b16 %v89, %v85
  %v150 = vpack.c.b16 %v90, %v86
  %v151 = vpack.c.b16 %v91, %v87
  %v152 = vpack.c.b16 %v96, %v92
  %v153 = vpack.c.b16 %v97, %v93
  %v154 = vpack.c.b16 %v98, %v94
  %v155 = vpack.c.b16 %v99, %v95
  %v156 = vpack.c.b16 %v104, %v100
  %v157 = vpack.c.b16 %v105, %v101
  %v158 = vpack.c.b16 %v106, %v102
  %v159 = vpack.c.b16 %v107, %v103
  %v160 = vpack.c.b16 %v112, %v108
  %v161 = vpack.c.b16 %v113, %v109
  %v162 = vpack.c.b16 %v114, %v110
  %v163 = vpack.c.b16 %v115, %v111
  %v164 = vpack.c.b16 %v120, %v116
  %v165 = vpack.c.b16 %v121, %v117
  %v166 = vpack.c.b16 %v122, %v118
  %v167 = vpack.c.b16 %v123, %v119
  %v168 = vpack.c.b16 %v128, %v124
  %v169 = vpack.c.b16 %v129, %v125
  %v170 = vpack.c.b16 %v130, %v126
  %v171 = vpack.c.b16 %v131, %v127
  %v172 = vpack.c.b16 %v136, %v132
  %v173 = vpack.c.b16 %v137, %v133
  %v174 = vpack.c.b16 %v138, %v134
  %v175 = vpack.c.b16 %v139, %v135
  %v176 = vpack.c.b16 %v144, %v140
  %v177 = vpack.c.b16 %v145, %v141
  %v178 = vpack.c.b16 %v146, %v142
  %v179 = vpack.c.b16 %v147, %v143
  %212 = vmatprep.subr.bf16.mxu0 %v149
  %213 = vmatpush1.bf16.msra.mxu0 %v148
  %214 = vmatprep.subr.bf16.mxu0 %v153
  %215 = vmatpush1.bf16.msra.mxu0 %v152
  %216 = vmatprep.subr.bf16.mxu0 %v157
  %217 = vmatpush1.bf16.msra.mxu0 %v156
  %218 = vmatprep.subr.bf16.mxu0 %v161
  %219 = vmatpush1.bf16.msra.mxu0 %v160
  %220 = vmatprep.subr.bf16.mxu0 %v165
  %221 = vmatpush1.bf16.msra.mxu0 %v164
  %222 = vmatprep.subr.bf16.mxu0 %v169
  %223 = vmatpush1.bf16.msra.mxu0 %v168
  %224 = vmatprep.subr.bf16.mxu0 %v173
  %225 = vmatpush1.bf16.msra.mxu0 %v172
  %226 = vmatprep.subr.bf16.mxu0 %v177
  %227 = vmatpush1.bf16.msra.mxu0 %v176
  %228 = vmatprep.subr.bf16.mxu0 0
  %229 = vmatpush1.bf16.msra.mxu0 0
  %230 = vmatprep.subr.bf16.mxu0 0
  %231 = vmatpush1.bf16.msra.mxu0 0
  %232 = vmatprep.subr.bf16.mxu0 0
  %233 = vmatpush1.bf16.msra.mxu0 0
  %234 = vmatprep.subr.bf16.mxu0 0
  %235 = vmatpush1.bf16.msra.mxu0 0
  %236 = vmatprep.subr.bf16.mxu0 0
  %237 = vmatpush1.bf16.msra.mxu0 0
  %238 = vmatprep.subr.bf16.mxu0 0
  %239 = vmatpush1.bf16.msra.mxu0 0
  %240 = vmatprep.subr.bf16.mxu0 0
  %241 = vmatpush1.bf16.msra.mxu0 0
  %242 = vmatprep.subr.bf16.mxu0 0
  %243 = vmatpush1.bf16.msra.mxu0 0
  %244 = vmatprep.mubr.bf16.mxu0 0
  %245 = vmatmul.mubr.bf16.gmra.mrb[0].mxu0 %v50
  %v246 = vpop.f32.mrb[0].mxu0
  %v247 = vadd.f32 0.0, %v246
  %v248 = vpop.f32.mrb[0].mxu0
  %v249 = vadd.f32 0.0, %v248
  %v250 = vpop.f32.mrb[0].mxu0
  %v251 = vadd.f32 0.0, %v250
  %v252 = vpop.f32.mrb[0].mxu0
  %v253 = vadd.f32 0.0, %v252
  %254 = vdwg.mxu0
  %255 = vmatprep.subr.bf16.mxu0 %v151
  %256 = vmatpush1.bf16.msra.mxu0 %v150
  %257 = vmatprep.subr.bf16.mxu0 %v155
  %258 = vmatpush1.bf16.msra.mxu0 %v154
  %259 = vmatprep.subr.bf16.mxu0 %v159
  %260 = vmatpush1.bf16.msra.mxu0 %v158
  %261 = vmatprep.subr.bf16.mxu0 %v163
  %262 = vmatpush1.bf16.msra.mxu0 %v162
  %263 = vmatprep.subr.bf16.mxu0 %v167
  %264 = vmatpush1.bf16.msra.mxu0 %v166
  %265 = vmatprep.subr.bf16.mxu0 %v171
  %266 = vmatpush1.bf16.msra.mxu0 %v170
  %267 = vmatprep.subr.bf16.mxu0 %v175
  %268 = vmatpush1.bf16.msra.mxu0 %v174
  %269 = vmatprep.subr.bf16.mxu0 %v179
  %270 = vmatpush1.bf16.msra.mxu0 %v178
  %271 = vmatprep.subr.bf16.mxu0 0
  %272 = vmatpush1.bf16.msra.mxu0 0
  %273 = vmatprep.subr.bf16.mxu0 0
  %274 = vmatpush1.bf16.msra.mxu0 0
  %275 = vmatprep.subr.bf16.mxu0 0
  %276 = vmatpush1.bf16.msra.mxu0 0
  %277 = vmatprep.subr.bf16.mxu0 0
  %278 = vmatpush1.bf16.msra.mxu0 0
  %279 = vmatprep.subr.bf16.mxu0 0
  %280 = vmatpush1.bf16.msra.mxu0 0
  %281 = vmatprep.subr.bf16.mxu0 0
  %282 = vmatpush1.bf16.msra.mxu0 0
  %283 = vmatprep.subr.bf16.mxu0 0
  %284 = vmatpush1.bf16.msra.mxu0 0
  %285 = vmatprep.subr.bf16.mxu0 0
  %286 = vmatpush1.bf16.msra.mxu0 0
  %287 = vmatprep.mubr.bf16.mxu0 0
  %288 = vmatmul.mubr.bf16.gmra.mrb[0].mxu0 %v50
  %v289 = vpop.f32.mrb[0].mxu0
  %v290 = vadd.f32 0.0, %v289
  %v291 = vpop.f32.mrb[0].mxu0
  %v292 = vadd.f32 0.0, %v291
  %v293 = vpop.f32.mrb[0].mxu0
  %v294 = vadd.f32 0.0, %v293
  %v295 = vpop.f32.mrb[0].mxu0
  %v296 = vadd.f32 0.0, %v295
  %297 = vdwg.mxu0
  %v298 = vmul.f32 %v247, 0.1
  %v299 = vmul.f32 %v249, 0.1
  %v300 = vmul.f32 %v290, 0.1
  %v301 = vmul.f32 %v292, 0.1
  %v302 = vmul.f32 %v251, 0.1
  %v303 = vmul.f32 %v253, 0.1
  %v304 = vmul.f32 %v294, 0.1
  %v305 = vmul.f32 %v296, 0.1
  %v306 = vmax.f32 %v247, %v298
  %v307 = vmax.f32 %v249, %v299
  %v308 = vmax.f32 %v290, %v300
  %v309 = vmax.f32 %v292, %v301
  %v310 = vmax.f32 %v251, %v302
  %v311 = vmax.f32 %v253, %v303
  %v312 = vmax.f32 %v294, %v304
  %v313 = vmax.f32 %v296, %v305
  %v314 = vpack.c.bf16 %v310, %v306
  %v315 = vpack.c.bf16 %v311, %v307
  %v316 = vpack.c.bf16 %v312, %v308
  %v317 = vpack.c.bf16 %v313, %v309
  %v322 = vunpack.c.l.b16 %v314
  %v323 = vunpack.c.l.b16 %v315
  %v324 = vunpack.c.l.b16 %v316
  %v325 = vunpack.c.l.b16 %v317
  %v326 = vunpack.c.h.b16 %v314
  %v327 = vunpack.c.h.b16 %v315
  %v328 = vunpack.c.h.b16 %v316
  %v329 = vunpack.c.h.b16 %v317
  %v330 = vpack.c.b16 %v323, %v322
  %v331 = vpack.c.b16 %v325, %v324
  %v332 = vpack.c.b16 %v327, %v326
  %v333 = vpack.c.b16 %v329, %v328
  %338 = vst [vmem:[%s2] sm:$0xff] %v330
  %339 = vst [vmem:[%s2 + $0x8] sm:$0xff] %v331
  %340 = vst [vmem:[%s2 + $0x10] sm:$0xff] %v332
  %341 = vst [vmem:[%s2 + $0x18] sm:$0xff] %v333
  // Predicated region
  $region10: #{_lambda_.8} parent=0 // pred_check
    _
  $region11: #{_lambda_.8} parent=0 // pred_check_branch
    %343 = sbr.rel (0) target = $region13
  $region12: #{_lambda_.8} parent=0 // pred_region
    _
  $region13: #{_lambda_.8} parent=0 // pred_fallthru
    _
  // Predicated region
  $region14: #{_lambda_.8} parent=0 // pred_check
    _
  $region15: #{_lambda_.8} parent=0 // pred_check_branch
    %345 = sbr.rel (0) target = $region17
  $region16: #{_lambda_.8} parent=0 // pred_region
    _
  $region17: #{_lambda_.8} parent=0 // pred_fallthru
    _

// kernel: _lambda_.9
$region0: #{_lambda_.9}
  #allocation0 [shape = 'u32[]', space=smem, size = 0x4, offset = 0x4, fixed_abs, tag = 'smem constant byte address 0x4 - core index']
  #allocation1 [shape = 'u32[144,128]{1,0:T(1,128)}', space=vmem, size = 0x12000, scoped, tag = 'internal scratch']
  %s0 = inlined_call_operand.vmem [shape: bf16[16,128], index: 0, kind: input, shape index: {}]
  %s1 = inlined_call_operand.vmem [shape: bf16[128,128], index: 1, kind: input, shape index: {}]
  %s2 = inlined_call_operand.vmem [shape: bf16[16,128], index: 2, kind: output, shape index: {}]
  %s3 = sld [smem:[#allocation0]]
  $region18: #{_lambda_.9} parent=0
    _
  %s5 = ssub.s32 1, %s3
  %s6 = scalar_select 0, %s5, %s3
  // Predicated region
  $region2: #{_lambda_.9} parent=0 // pred_check
    _
  $region3: #{_lambda_.9} parent=0 // pred_check_branch
    %8 = sbr.rel (0) target = $region5
  $region4: #{_lambda_.9} parent=0 // pred_region
    _
  $region5: #{_lambda_.9} parent=0 // pred_fallthru
    _
  // Predicated region
  $region6: #{_lambda_.9} parent=0 // pred_check
    _
  $region7: #{_lambda_.9} parent=0 // pred_check_branch
    %10 = sbr.rel (0) target = $region9
  $region8: #{_lambda_.9} parent=0 // pred_region
    _
  $region9: #{_lambda_.9} parent=0 // pred_fallthru
    _
  %v12 = vld [vmem:[%s0] sm:$0xf]
  %v13 = vld [vmem:[%s0 + $0x4] sm:$0xf]
  %v14 = vld [vmem:[%s1] sm:$0xf]
  %v15 = vld [vmem:[%s1 + $0x4] sm:$0xf]
  %v16 = vld [vmem:[%s1 + $0x8] sm:$0xf]
  %v17 = vld [vmem:[%s1 + $0xc] sm:$0xf]
  %v18 = vld [vmem:[%s1 + $0x10] sm:$0xf]
  %v19 = vld [vmem:[%s1 + $0x14] sm:$0xf]
  %v20 = vld [vmem:[%s1 + $0x18] sm:$0xf]
  %v21 = vld [vmem:[%s1 + $0x1c] sm:$0xf]
  %v22 = vld [vmem:[%s1 + $0x20] sm:$0xf]
  %v23 = vld [vmem:[%s1 + $0x24] sm:$0xf]
  %v24 = vld [vmem:[%s1 + $0x28] sm:$0xf]
  %v25 = vld [vmem:[%s1 + $0x2c] sm:$0xf]
  %v26 = vld [vmem:[%s1 + $0x30] sm:$0xf]
  %v27 = vld [vmem:[%s1 + $0x34] sm:$0xf]
  %v28 = vld [vmem:[%s1 + $0x38] sm:$0xf]
  %v29 = vld [vmem:[%s1 + $0x3c] sm:$0xf]
  %v32 = vunpack.c.l.b16 %v12
  %v33 = vunpack.c.l.b16 %v13
  %v34 = vpack.c.b16 %v33, %v32
  %v52 = vunpack.c.l.b16 %v14
  %v53 = vunpack.c.l.b16 %v15
  %v54 = vunpack.c.l.b16 %v16
  %v55 = vunpack.c.l.b16 %v17
  %v56 = vunpack.c.l.b16 %v18
  %v57 = vunpack.c.l.b16 %v19
  %v58 = vunpack.c.l.b16 %v20
  %v59 = vunpack.c.l.b16 %v21
  %v60 = vunpack.c.l.b16 %v22
  %v61 = vunpack.c.l.b16 %v23
  %v62 = vunpack.c.l.b16 %v24
  %v63 = vunpack.c.l.b16 %v25
  %v64 = vunpack.c.l.b16 %v26
  %v65 = vunpack.c.l.b16 %v27
  %v66 = vunpack.c.l.b16 %v28
  %v67 = vunpack.c.l.b16 %v29
  %v68 = vpack.c.b16 %v53, %v52
  %v69 = vpack.c.b16 %v55, %v54
  %v70 = vpack.c.b16 %v57, %v56
  %v71 = vpack.c.b16 %v59, %v58
  %v72 = vpack.c.b16 %v61, %v60
  %v73 = vpack.c.b16 %v63, %v62
  %v74 = vpack.c.b16 %v65, %v64
  %v75 = vpack.c.b16 %v67, %v66
  %84 = vmatprep.subr.bf16.mxu0 0
  %85 = vmatpush1.bf16.msra.mxu0 %v68
  %86 = vmatprep.subr.bf16.mxu0 0
  %87 = vmatpush1.bf16.msra.mxu0 %v69
  %88 = vmatprep.subr.bf16.mxu0 0
  %89 = vmatpush1.bf16.msra.mxu0 %v70
  %90 = vmatprep.subr.bf16.mxu0 0
  %91 = vmatpush1.bf16.msra.mxu0 %v71
  %92 = vmatprep.subr.bf16.mxu0 0
  %93 = vmatpush1.bf16.msra.mxu0 %v72
  %94 = vmatprep.subr.bf16.mxu0 0
  %95 = vmatpush1.bf16.msra.mxu0 %v73
  %96 = vmatprep.subr.bf16.mxu0 0
  %97 = vmatpush1.bf16.msra.mxu0 %v74
  %98 = vmatprep.subr.bf16.mxu0 0
  %99 = vmatpush1.bf16.msra.mxu0 %v75
  %100 = vmatprep.subr.bf16.mxu0 0
  %101 = vmatpush1.bf16.msra.mxu0 0
  %102 = vmatprep.subr.bf16.mxu0 0
  %103 = vmatpush1.bf16.msra.mxu0 0
  %104 = vmatprep.subr.bf16.mxu0 0
  %105 = vmatpush1.bf16.msra.mxu0 0
  %106 = vmatprep.subr.bf16.mxu0 0
  %107 = vmatpush1.bf16.msra.mxu0 0
  %108 = vmatprep.subr.bf16.mxu0 0
  %109 = vmatpush1.bf16.msra.mxu0 0
  %110 = vmatprep.subr.bf16.mxu0 0
  %111 = vmatpush1.bf16.msra.mxu0 0
  %112 = vmatprep.subr.bf16.mxu0 0
  %113 = vmatpush1.bf16.msra.mxu0 0
  %114 = vmatprep.subr.bf16.mxu0 0
  %115 = vmatpush1.bf16.msra.mxu0 0
  %116 = vmatprep.mubr.bf16.mxu0 0
  %117 = vmatmul.mubr.bf16.gmra.mrb[0].mxu0 %v34
  %v118 = vpop.f32.mrb[0].mxu0
  %v119 = vadd.f32 0.0, %v118
  %v120 = vpop.f32.mrb[0].mxu0
  %v121 = vpop.f32.mrb[0].mxu0
  %v122 = vadd.f32 0.0, %v121
  %v123 = vpop.f32.mrb[0].mxu0
  %124 = vdwg.mxu0
  %v125 = vmul.f32 %v119, 0.1
  %v126 = vmul.f32 %v122, 0.1
  %v127 = vmax.f32 %v119, %v125
  %v128 = vmax.f32 %v122, %v126
  %v129 = vpack.c.bf16 %v128, %v127
  %v131 = vunpack.c.l.b16 %v129
  %v132 = vunpack.c.h.b16 %v129
  %v133 = vpack.c.b16 %v131, %v131
  %v134 = vpack.c.b16 %v132, %v132
  %137 = vst [vmem:[%s2] sm:$0xf] %v133
  %138 = vst [vmem:[%s2 + $0x4] sm:$0xf] %v134
  // Predicated region
  $region10: #{_lambda_.9} parent=0 // pred_check
    _
  $region11: #{_lambda_.9} parent=0 // pred_check_branch
    %140 = sbr.rel (0) target = $region13
  $region12: #{_lambda_.9} parent=0 // pred_region
    _
  $region13: #{_lambda_.9} parent=0 // pred_fallthru
    _
  // Predicated region
  $region14: #{_lambda_.9} parent=0 // pred_check
    _
  $region15: #{_lambda_.9} parent=0 // pred_check_branch
    %142 = sbr.rel (0) target = $region17
  $region16: #{_lambda_.9} parent=0 // pred_region
    _
  $region17: #{_lambda_.9} parent=0 // pred_fallthru
    _

// kernel: _lambda_.15
$region0: #{_lambda_.15}
  #allocation0 [shape = 'u32[]', space=smem, size = 0x4, offset = 0x4, fixed_abs, tag = 'smem constant byte address 0x4 - core index']
  #allocation1 [shape = 'u32[144,128]{1,0:T(1,128)}', space=vmem, size = 0x12000, scoped, tag = 'internal scratch']
  %s0 = inlined_call_operand.vmem [shape: bf16[32,128], index: 0, kind: input, shape index: {}]
  %s1 = inlined_call_operand.vmem [shape: bf16[128,512], index: 1, kind: input, shape index: {}]
  %s2 = inlined_call_operand.vmem [shape: f32[32,512], index: 2, kind: output, shape index: {}]
  %s3 = sld [smem:[#allocation0]]
  $region18: #{_lambda_.15} parent=0
    _
  %s5 = ssub.s32 1, %s3
  %s6 = scalar_select 0, %s5, %s3
  // Predicated region
  $region2: #{_lambda_.15} parent=0 // pred_check
    _
  $region3: #{_lambda_.15} parent=0 // pred_check_branch
    %8 = sbr.rel (0) target = $region5
  $region4: #{_lambda_.15} parent=0 // pred_region
    _
  $region5: #{_lambda_.15} parent=0 // pred_fallthru
    _
  // Predicated region
  $region6: #{_lambda_.15} parent=0 // pred_check
    _
  $region7: #{_lambda_.15} parent=0 // pred_check_branch
    %10 = sbr.rel (0) target = $region9
  $region8: #{_lambda_.15} parent=0 // pred_region
    _
  $region9: #{_lambda_.15} parent=0 // pred_fallthru
    _
  %v12 = vld [vmem:[%s0] sm:$0xf]
  %v13 = vld [vmem:[%s0 + $0x4] sm:$0xf]
  %v14 = vld [vmem:[%s0 + $0x8] sm:$0xf]
  %v15 = vld [vmem:[%s0 + $0xc] sm:$0xf]
  %v16 = vld [vmem:[%s1] sm:$0xff]
  %v17 = vld [vmem:[%s1 + $0x8] sm:$0xff]
  %v18 = vld [vmem:[%s1 + $0x10] sm:$0xff]
  %v19 = vld [vmem:[%s1 + $0x18] sm:$0xff]
  %v20 = vld [vmem:[%s1 + $0x20] sm:$0xff]
  %v21 = vld [vmem:[%s1 + $0x28] sm:$0xff]
  %v22 = vld [vmem:[%s1 + $0x30] sm:$0xff]
  %v23 = vld [vmem:[%s1 + $0x38] sm:$0xff]
  %v24 = vld [vmem:[%s1 + $0x40] sm:$0xff]
  %v25 = vld [vmem:[%s1 + $0x48] sm:$0xff]
  %v26 = vld [vmem:[%s1 + $0x50] sm:$0xff]
  %v27 = vld [vmem:[%s1 + $0x58] sm:$0xff]
  %v28 = vld [vmem:[%s1 + $0x60] sm:$0xff]
  %v29 = vld [vmem:[%s1 + $0x68] sm:$0xff]
  %v30 = vld [vmem:[%s1 + $0x70] sm:$0xff]
  %v31 = vld [vmem:[%s1 + $0x78] sm:$0xff]
  %v32 = vld [vmem:[%s1 + $0x80] sm:$0xff]
  %v33 = vld [vmem:[%s1 + $0x88] sm:$0xff]
  %v34 = vld [vmem:[%s1 + $0x90] sm:$0xff]
  %v35 = vld [vmem:[%s1 + $0x98] sm:$0xff]
  %v36 = vld [vmem:[%s1 + $0xa0] sm:$0xff]
  %v37 = vld [vmem:[%s1 + $0xa8] sm:$0xff]
  %v38 = vld [vmem:[%s1 + $0xb0] sm:$0xff]
  %v39 = vld [vmem:[%s1 + $0xb8] sm:$0xff]
  %v40 = vld [vmem:[%s1 + $0xc0] sm:$0xff]
  %v41 = vld [vmem:[%s1 + $0xc8] sm:$0xff]
  %v42 = vld [vmem:[%s1 + $0xd0] sm:$0xff]
  %v43 = vld [vmem:[%s1 + $0xd8] sm:$0xff]
  %v44 = vld [vmem:[%s1 + $0xe0] sm:$0xff]
  %v45 = vld [vmem:[%s1 + $0xe8] sm:$0xff]
  %v46 = vld [vmem:[%s1 + $0xf0] sm:$0xff]
  %v47 = vld [vmem:[%s1 + $0xf8] sm:$0xff]
  %v52 = vunpack.c.l.b16 %v12
  %v53 = vunpack.c.l.b16 %v13
  %v54 = vunpack.c.l.b16 %v14
  %v55 = vunpack.c.l.b16 %v15
  %v56 = vpack.c.b16 %v53, %v52
  %v57 = vpack.c.b16 %v55, %v54
  %v92 = vunpack.c.l.b16 %v16
  %v93 = vunpack.c.h.b16 %v16
  %v94 = vunpack.c.l.b16 %v17
  %v95 = vunpack.c.h.b16 %v17
  %v96 = vunpack.c.l.b16 %v18
  %v97 = vunpack.c.h.b16 %v18
  %v98 = vunpack.c.l.b16 %v19
  %v99 = vunpack.c.h.b16 %v19
  %v100 = vunpack.c.l.b16 %v20
  %v101 = vunpack.c.h.b16 %v20
  %v102 = vunpack.c.l.b16 %v21
  %v103 = vunpack.c.h.b16 %v21
  %v104 = vunpack.c.l.b16 %v22
  %v105 = vunpack.c.h.b16 %v22
  %v106 = vunpack.c.l.b16 %v23
  %v107 = vunpack.c.h.b16 %v23
  %v108 = vunpack.c.l.b16 %v24
  %v109 = vunpack.c.h.b16 %v24
  %v110 = vunpack.c.l.b16 %v25
  %v111 = vunpack.c.h.b16 %v25
  %v112 = vunpack.c.l.b16 %v26
  %v113 = vunpack.c.h.b16 %v26
  %v114 = vunpack.c.l.b16 %v27
  %v115 = vunpack.c.h.b16 %v27
  %v116 = vunpack.c.l.b16 %v28
  %v117 = vunpack.c.h.b16 %v28
  %v118 = vunpack.c.l.b16 %v29
  %v119 = vunpack.c.h.b16 %v29
  %v120 = vunpack.c.l.b16 %v30
  %v121 = vunpack.c.h.b16 %v30
  %v122 = vunpack.c.l.b16 %v31
  %v123 = vunpack.c.h.b16 %v31
  %v124 = vunpack.c.l.b16 %v32
  %v125 = vunpack.c.h.b16 %v32
  %v126 = vunpack.c.l.b16 %v33
  %v127 = vunpack.c.h.b16 %v33
  %v128 = vunpack.c.l.b16 %v34
  %v129 = vunpack.c.h.b16 %v34
  %v130 = vunpack.c.l.b16 %v35
  %v131 = vunpack.c.h.b16 %v35
  %v132 = vunpack.c.l.b16 %v36
  %v133 = vunpack.c.h.b16 %v36
  %v134 = vunpack.c.l.b16 %v37
  %v135 = vunpack.c.h.b16 %v37
  %v136 = vunpack.c.l.b16 %v38
  %v137 = vunpack.c.h.b16 %v38
  %v138 = vunpack.c.l.b16 %v39
  %v139 = vunpack.c.h.b16 %v39
  %v140 = vunpack.c.l.b16 %v40
  %v141 = vunpack.c.h.b16 %v40
  %v142 = vunpack.c.l.b16 %v41
  %v143 = vunpack.c.h.b16 %v41
  %v144 = vunpack.c.l.b16 %v42
  %v145 = vunpack.c.h.b16 %v42
  %v146 = vunpack.c.l.b16 %v43
  %v147 = vunpack.c.h.b16 %v43
  %v148 = vunpack.c.l.b16 %v44
  %v149 = vunpack.c.h.b16 %v44
  %v150 = vunpack.c.l.b16 %v45
  %v151 = vunpack.c.h.b16 %v45
  %v152 = vunpack.c.l.b16 %v46
  %v153 = vunpack.c.h.b16 %v46
  %v154 = vunpack.c.l.b16 %v47
  %v155 = vunpack.c.h.b16 %v47
  %v156 = vpack.c.b16 %v96, %v92
  %v157 = vpack.c.b16 %v97, %v93
  %v158 = vpack.c.b16 %v98, %v94
  %v159 = vpack.c.b16 %v99, %v95
  %v160 = vpack.c.b16 %v104, %v100
  %v161 = vpack.c.b16 %v105, %v101
  %v162 = vpack.c.b16 %v106, %v102
  %v163 = vpack.c.b16 %v107, %v103
  %v164 = vpack.c.b16 %v112, %v108
  %v165 = vpack.c.b16 %v113, %v109
  %v166 = vpack.c.b16 %v114, %v110
  %v167 = vpack.c.b16 %v115, %v111
  %v168 = vpack.c.b16 %v120, %v116
  %v169 = vpack.c.b16 %v121, %v117
  %v170 = vpack.c.b16 %v122, %v118
  %v171 = vpack.c.b16 %v123, %v119
  %v172 = vpack.c.b16 %v128, %v124
  %v173 = vpack.c.b16 %v129, %v125
  %v174 = vpack.c.b16 %v130, %v126
  %v175 = vpack.c.b16 %v131, %v127
  %v176 = vpack.c.b16 %v136, %v132
  %v177 = vpack.c.b16 %v137, %v133
  %v178 = vpack.c.b16 %v138, %v134
  %v179 = vpack.c.b16 %v139, %v135
  %v180 = vpack.c.b16 %v144, %v140
  %v181 = vpack.c.b16 %v145, %v141
  %v182 = vpack.c.b16 %v146, %v142
  %v183 = vpack.c.b16 %v147, %v143
  %v184 = vpack.c.b16 %v152, %v148
  %v185 = vpack.c.b16 %v153, %v149
  %v186 = vpack.c.b16 %v154, %v150
  %v187 = vpack.c.b16 %v155, %v151
  %220 = vmatprep.subr.bf16.mxu0 %v157
  %221 = vmatpush1.bf16.msra.mxu0 %v156
  %222 = vmatprep.subr.bf16.mxu0 %v161
  %223 = vmatpush1.bf16.msra.mxu0 %v160
  %224 = vmatprep.subr.bf16.mxu0 %v165
  %225 = vmatpush1.bf16.msra.mxu0 %v164
  %226 = vmatprep.subr.bf16.mxu0 %v169
  %227 = vmatpush1.bf16.msra.mxu0 %v168
  %228 = vmatprep.subr.bf16.mxu0 %v173
  %229 = vmatpush1.bf16.msra.mxu0 %v172
  %230 = vmatprep.subr.bf16.mxu0 %v177
  %231 = vmatpush1.bf16.msra.mxu0 %v176
  %232 = vmatprep.subr.bf16.mxu0 %v181
  %233 = vmatpush1.bf16.msra.mxu0 %v180
  %234 = vmatprep.subr.bf16.mxu0 %v185
  %235 = vmatpush1.bf16.msra.mxu0 %v184
  %236 = vmatprep.subr.bf16.mxu0 0
  %237 = vmatpush1.bf16.msra.mxu0 0
  %238 = vmatprep.subr.bf16.mxu0 0
  %239 = vmatpush1.bf16.msra.mxu0 0
  %240 = vmatprep.subr.bf16.mxu0 0
  %241 = vmatpush1.bf16.msra.mxu0 0
  %242 = vmatprep.subr.bf16.mxu0 0
  %243 = vmatpush1.bf16.msra.mxu0 0
  %244 = vmatprep.subr.bf16.mxu0 0
  %245 = vmatpush1.bf16.msra.mxu0 0
  %246 = vmatprep.subr.bf16.mxu0 0
  %247 = vmatpush1.bf16.msra.mxu0 0
  %248 = vmatprep.subr.bf16.mxu0 0
  %249 = vmatpush1.bf16.msra.mxu0 0
  %250 = vmatprep.subr.bf16.mxu0 0
  %251 = vmatpush1.bf16.msra.mxu0 0
  %252 = vmatprep.mubr.bf16.mxu0 0
  %253 = vmatmul.mubr.bf16.gmra.mrb[0].mxu0 %v56
  %v254 = vpop.f32.mrb[0].mxu0
  %v255 = vadd.f32 0.0, %v254
  %v256 = vpop.f32.mrb[0].mxu0
  %v257 = vadd.f32 0.0, %v256
  %v258 = vpop.f32.mrb[0].mxu0
  %v259 = vadd.f32 0.0, %v258
  %v260 = vpop.f32.mrb[0].mxu0
  %v261 = vadd.f32 0.0, %v260
  %262 = vmatprep.mubr.bf16.mxu0 0
  %263 = vmatmul.mubr.bf16.gmra.mrb[0].mxu0 %v57
  %v264 = vpop.f32.mrb[0].mxu0
  %v265 = vadd.f32 0.0, %v264
  %v266 = vpop.f32.mrb[0].mxu0
  %v267 = vadd.f32 0.0, %v266
  %v268 = vpop.f32.mrb[0].mxu0
  %v269 = vadd.f32 0.0, %v268
  %v270 = vpop.f32.mrb[0].mxu0
  %v271 = vadd.f32 0.0, %v270
  %272 = vdwg.mxu0
  %273 = vmatprep.subr.bf16.mxu0 %v159
  %274 = vmatpush1.bf16.msra.mxu0 %v158
  %275 = vmatprep.subr.bf16.mxu0 %v163
  %276 = vmatpush1.bf16.msra.mxu0 %v162
  %277 = vmatprep.subr.bf16.mxu0 %v167
  %278 = vmatpush1.bf16.msra.mxu0 %v166
  %279 = vmatprep.subr.bf16.mxu0 %v171
  %280 = vmatpush1.bf16.msra.mxu0 %v170
  %281 = vmatprep.subr.bf16.mxu0 %v175
  %282 = vmatpush1.bf16.msra.mxu0 %v174
  %283 = vmatprep.subr.bf16.mxu0 %v179
  %284 = vmatpush1.bf16.msra.mxu0 %v178
  %285 = vmatprep.subr.bf16.mxu0 %v183
  %286 = vmatpush1.bf16.msra.mxu0 %v182
  %287 = vmatprep.subr.bf16.mxu0 %v187
  %288 = vmatpush1.bf16.msra.mxu0 %v186
  %289 = vmatprep.subr.bf16.mxu0 0
  %290 = vmatpush1.bf16.msra.mxu0 0
  %291 = vmatprep.subr.bf16.mxu0 0
  %292 = vmatpush1.bf16.msra.mxu0 0
  %293 = vmatprep.subr.bf16.mxu0 0
  %294 = vmatpush1.bf16.msra.mxu0 0
  %295 = vmatprep.subr.bf16.mxu0 0
  %296 = vmatpush1.bf16.msra.mxu0 0
  %297 = vmatprep.subr.bf16.mxu0 0
  %298 = vmatpush1.bf16.msra.mxu0 0
  %299 = vmatprep.subr.bf16.mxu0 0
  %300 = vmatpush1.bf16.msra.mxu0 0
  %301 = vmatprep.subr.bf16.mxu0 0
  %302 = vmatpush1.bf16.msra.mxu0 0
  %303 = vmatprep.subr.bf16.mxu0 0
  %304 = vmatpush1.bf16.msra.mxu0 0
  %305 = vmatprep.mubr.bf16.mxu0 0
  %306 = vmatmul.mubr.bf16.gmra.mrb[0].mxu0 %v56
  %v307 = vpop.f32.mrb[0].mxu0
  %v308 = vadd.f32 0.0, %v307
  %v309 = vpop.f32.mrb[0].mxu0
  %v310 = vadd.f32 0.0, %v309
  %v311 = vpop.f32.mrb[0].mxu0
  %v312 = vadd.f32 0.0, %v311
  %v313 = vpop.f32.mrb[0].mxu0
  %v314 = vadd.f32 0.0, %v313
  %315 = vmatprep.mubr.bf16.mxu0 0
  %316 = vmatmul.mubr.bf16.gmra.mrb[0].mxu0 %v57
  %v317 = vpop.f32.mrb[0].mxu0
  %v318 = vadd.f32 0.0, %v317
  %v319 = vpop.f32.mrb[0].mxu0
  %v320 = vadd.f32 0.0, %v319
  %v321 = vpop.f32.mrb[0].mxu0
  %v322 = vadd.f32 0.0, %v321
  %v323 = vpop.f32.mrb[0].mxu0
  %v324 = vadd.f32 0.0, %v323
  %325 = vdwg.mxu0
  %s326 = smul.u32 0, 512
  %v327 = vlaneseq
  %v328 = vshrl.u32 %v327, 7
  %v329 = vadd.s32 %v328, 8
  %v330 = vadd.s32 %v328, 16
  %v331 = vadd.s32 %v328, 24
  %v332 = vlaneseq
  %v333 = vand.u32 %v332, 127
  %v334 = vadd.s32 %v333, 128
  %v335 = vadd.s32 %v333, 256
  %v336 = vadd.s32 %v333, 384
  %v337 = vstv %s326
  %v338 = vadd.s32 %v333, %v337
  %v339 = vadd.s32 %v334, %v337
  %v340 = vadd.s32 %v335, %v337
  %v341 = vadd.s32 %v336, %v337
  %v342 = vand.u32 %v328, 7
  %v343 = vand.u32 %v329, 7
  %v344 = vand.u32 %v330, 7
  %v345 = vand.u32 %v331, 7
  %v346 = vshra.s32 %v328, 3
  %v347 = vshra.s32 %v329, 3
  %v348 = vshra.s32 %v330, 3
  %v349 = vshra.s32 %v331, 3
  %v350 = vand.u32 %v338, 15
  %v351 = vand.u32 %v339, 15
  %v352 = vand.u32 %v340, 15
  %v353 = vand.u32 %v341, 15
  %v354 = vshra.s32 %v338, 4
  %v355 = vshra.s32 %v339, 4
  %v356 = vshra.s32 %v340, 4
  %v357 = vshra.s32 %v341, 4
  %v358 = vand.u32 %v354, 15
  %v359 = vand.u32 %v355, 15
  %v360 = vand.u32 %v356, 15
  %v361 = vand.u32 %v357, 15
  %v362 = vcvt.s32.f32 %v350
  %v363 = vcvt.s32.f32 %v351
  %v364 = vcvt.s32.f32 %v352
  %v365 = vcvt.s32.f32 %v353
  %v366 = vcvt.s32.f32 %v358
  %v367 = vcvt.s32.f32 %v359
  %v368 = vcvt.s32.f32 %v360
  %v369 = vcvt.s32.f32 %v361
  %vm370 = vcmp.eq.s32.totalorder %v346, 1
  %vm371 = vcmp.eq.s32.totalorder %v347, 1
  %vm372 = vcmp.eq.s32.totalorder %v348, 1
  %vm373 = vcmp.eq.s32.totalorder %v349, 1
  %v374 = vsel %vm370, 10.0, 12.0
  %v375 = vsel %vm371, 10.0, 12.0
  %v376 = vsel %vm372, 10.0, 12.0
  %v377 = vsel %vm373, 10.0, 12.0
  %v378 = vsel %vm370, 12.0, 14.0
  %v379 = vsel %vm371, 12.0, 14.0
  %v380 = vsel %vm372, 12.0, 14.0
  %v381 = vsel %vm373, 12.0, 14.0
  %vm382 = vcmp.eq.s32.totalorder %v346, 0
  %vm383 = vcmp.eq.s32.totalorder %v347, 0
  %vm384 = vcmp.eq.s32.totalorder %v348, 0
  %vm385 = vcmp.eq.s32.totalorder %v349, 0
  %v386 = vsel %vm382, 8.0, %v374
  %v387 = vsel %vm383, 8.0, %v375
  %v388 = vsel %vm384, 8.0, %v376
  %v389 = vsel %vm385, 8.0, %v377
  %v390 = vsel %vm382, 10.0, %v378
  %v391 = vsel %vm383, 10.0, %v379
  %v392 = vsel %vm384, 10.0, %v380
  %v393 = vsel %vm385, 10.0, %v381
  %vm394 = vcmp.eq.s32.totalorder %v342, 0
  %vm395 = vcmp.eq.s32.totalorder %v343, 0
  %vm396 = vcmp.eq.s32.totalorder %v344, 0
  %vm397 = vcmp.eq.s32.totalorder %v345, 0
  %v398 = vsel %vm394, 1, 0
  %v399 = vsel %vm395, 1, 0
  %v400 = vsel %vm396, 1, 0
  %v401 = vsel %vm397, 1, 0
  %vm402 = vcmp.eq.s32.totalorder %v398, 1
  %vm403 = vcmp.eq.s32.totalorder %v399, 1
  %vm404 = vcmp.eq.s32.totalorder %v400, 1
  %vm405 = vcmp.eq.s32.totalorder %v401, 1
  %v406 = vsel %vm402, %v362, %v366
  %v407 = vsel %vm402, %v363, %v367
  %v408 = vsel %vm402, %v364, %v368
  %v409 = vsel %vm402, %v365, %v369
  %v410 = vsel %vm403, %v362, %v366
  %v411 = vsel %vm403, %v363, %v367
  %v412 = vsel %vm403, %v364, %v368
  %v413 = vsel %vm403, %v365, %v369
  %v414 = vsel %vm404, %v362, %v366
  %v415 = vsel %vm404, %v363, %v367
  %v416 = vsel %vm404, %v364, %v368
  %v417 = vsel %vm404, %v365, %v369
  %v418 = vsel %vm405, %v362, %v366
  %v419 = vsel %vm405, %v363, %v367
  %v420 = vsel %vm405, %v364, %v368
  %v421 = vsel %vm405, %v365, %v369
  %vm422 = vcmp.eq.s32.totalorder %v342, 2
  %vm423 = vcmp.eq.s32.totalorder %v343, 2
  %vm424 = vcmp.eq.s32.totalorder %v344, 2
  %vm425 = vcmp.eq.s32.totalorder %v345, 2
  %v426 = vsel %vm422, %v386, %v390
  %v427 = vsel %vm423, %v387, %v391
  %v428 = vsel %vm424, %v388, %v392
  %v429 = vsel %vm425, %v389, %v393
  %v430 = vmul.f32 %v255, 1.442695
  %v431 = vpow.pop %v430
  %v432 = vmul.f32 %v257, 1.442695
  %v433 = vpow.pop %v432
  %v434 = vmul.f32 %v308, 1.442695
  %v435 = vpow.pop %v434
  %v436 = vmul.f32 %v310, 1.442695
  %v437 = vpow.pop %v436
  %v438 = vmul.f32 %v259, 1.442695
  %v439 = vpow.pop %v438
  %v440 = vmul.f32 %v261, 1.442695
  %v441 = vpow.pop %v440
  %v442 = vmul.f32 %v312, 1.442695
  %v443 = vpow.pop %v442
  %v444 = vmul.f32 %v314, 1.442695
  %v445 = vpow.pop %v444
  %v446 = vmul.f32 %v265, 1.442695
  %v447 = vpow.pop %v446
  %v448 = vmul.f32 %v267, 1.442695
  %v449 = vpow.pop %v448
  %v450 = vmul.f32 %v318, 1.442695
  %v451 = vpow.pop %v450
  %v452 = vmul.f32 %v320, 1.442695
  %v453 = vpow.pop %v452
  %v454 = vmul.f32 %v269, 1.442695
  %v455 = vpow.pop %v454
  %v456 = vmul.f32 %v271, 1.442695
  %v457 = vpow.pop %v456
  %v458 = vmul.f32 %v322, 1.442695
  %v459 = vpow.pop %v458
  %v460 = vmul.f32 %v324, 1.442695
  %v461 = vpow.pop %v460
  %vm462 = vcmp.gt.f32.partialorder %v255, 20.0
  %vm463 = vcmp.gt.f32.partialorder %v257, 20.0
  %vm464 = vcmp.gt.f32.partialorder %v308, 20.0
  %vm465 = vcmp.gt.f32.partialorder %v310, 20.0
  %vm466 = vcmp.gt.f32.partialorder %v259, 20.0
  %vm467 = vcmp.gt.f32.partialorder %v261, 20.0
  %vm468 = vcmp.gt.f32.partialorder %v312, 20.0
  %vm469 = vcmp.gt.f32.partialorder %v314, 20.0
  %vm470 = vcmp.gt.f32.partialorder %v265, 20.0
  %vm471 = vcmp.gt.f32.partialorder %v267, 20.0
  %vm472 = vcmp.gt.f32.partialorder %v318, 20.0
  %vm473 = vcmp.gt.f32.partialorder %v320, 20.0
  %vm474 = vcmp.gt.f32.partialorder %v269, 20.0
  %vm475 = vcmp.gt.f32.partialorder %v271, 20.0
  %vm476 = vcmp.gt.f32.partialorder %v322, 20.0
  %vm477 = vcmp.gt.f32.partialorder %v324, 20.0
  %v478 = vadd.f32 %v431, 1.0
  %v479 = vadd.f32 %v433, 1.0
  %v480 = vadd.f32 %v435, 1.0
  %v481 = vadd.f32 %v437, 1.0
  %v482 = vadd.f32 %v439, 1.0
  %v483 = vadd.f32 %v441, 1.0
  %v484 = vadd.f32 %v443, 1.0
  %v485 = vadd.f32 %v445, 1.0
  %v486 = vadd.f32 %v447, 1.0
  %v487 = vadd.f32 %v449, 1.0
  %v488 = vadd.f32 %v451, 1.0
  %v489 = vadd.f32 %v453, 1.0
  %v490 = vadd.f32 %v455, 1.0
  %v491 = vadd.f32 %v457, 1.0
  %v492 = vadd.f32 %v459, 1.0
  %v493 = vadd.f32 %v461, 1.0
  %v494 = vrcp.pop %v478
  %v495 = vmul.f32 %v431, %v494
  %v496 = vrcp.pop %v479
  %v497 = vmul.f32 %v433, %v496
  %v498 = vrcp.pop %v480
  %v499 = vmul.f32 %v435, %v498
  %v500 = vrcp.pop %v481
  %v501 = vmul.f32 %v437, %v500
  %v502 = vrcp.pop %v482
  %v503 = vmul.f32 %v439, %v502
  %v504 = vrcp.pop %v483
  %v505 = vmul.f32 %v441, %v504
  %v506 = vrcp.pop %v484
  %v507 = vmul.f32 %v443, %v506
  %v508 = vrcp.pop %v485
  %v509 = vmul.f32 %v445, %v508
  %v510 = vrcp.pop %v486
  %v511 = vmul.f32 %v447, %v510
  %v512 = vrcp.pop %v487
  %v513 = vmul.f32 %v449, %v512
  %v514 = vrcp.pop %v488
  %v515 = vmul.f32 %v451, %v514
  %v516 = vrcp.pop %v489
  %v517 = vmul.f32 %v453, %v516
  %v518 = vrcp.pop %v490
  %v519 = vmul.f32 %v455, %v518
  %v520 = vrcp.pop %v491
  %v521 = vmul.f32 %v457, %v520
  %v522 = vrcp.pop %v492
  %v523 = vmul.f32 %v459, %v522
  %v524 = vrcp.pop %v493
  %v525 = vmul.f32 %v461, %v524
  %v526 = vsel %vm462, 1.0, %v495
  %v527 = vsel %vm463, 1.0, %v497
  %v528 = vsel %vm464, 1.0, %v499
  %v529 = vsel %vm465, 1.0, %v501
  %v530 = vsel %vm466, 1.0, %v503
  %v531 = vsel %vm467, 1.0, %v505
  %v532 = vsel %vm468, 1.0, %v507
  %v533 = vsel %vm469, 1.0, %v509
  %v534 = vsel %vm470, 1.0, %v511
  %v535 = vsel %vm471, 1.0, %v513
  %v536 = vsel %vm472, 1.0, %v515
  %v537 = vsel %vm473, 1.0, %v517
  %v538 = vsel %vm474, 1.0, %v519
  %v539 = vsel %vm475, 1.0, %v521
  %v540 = vsel %vm476, 1.0, %v523
  %v541 = vsel %vm477, 1.0, %v525
  %v542 = vadd.f32 %v526, %v406
  %v543 = vadd.f32 %v527, %v407
  %v544 = vadd.f32 %v528, %v408
  %v545 = vadd.f32 %v529, %v409
  %v546 = vadd.f32 %v530, %v410
  %v547 = vadd.f32 %v531, %v411
  %v548 = vadd.f32 %v532, %v412
  %v549 = vadd.f32 %v533, %v413
  %v550 = vadd.f32 %v534, %v414
  %v551 = vadd.f32 %v535, %v415
  %v552 = vadd.f32 %v536, %v416
  %v553 = vadd.f32 %v537, %v417
  %v554 = vadd.f32 %v538, %v418
  %v555 = vadd.f32 %v539, %v419
  %v556 = vadd.f32 %v540, %v420
  %v557 = vadd.f32 %v541, %v421
  %v558 = vmul.f32 %v431, %v426
  %v559 = vmul.f32 %v433, %v426
  %v560 = vmul.f32 %v435, %v426
  %v561 = vmul.f32 %v437, %v426
  %v562 = vmul.f32 %v439, %v427
  %v563 = vmul.f32 %v441, %v427
  %v564 = vmul.f32 %v443, %v427
  %v565 = vmul.f32 %v445, %v427
  %v566 = vmul.f32 %v447, %v428
  %v567 = vmul.f32 %v449, %v428
  %v568 = vmul.f32 %v451, %v428
  %v569 = vmul.f32 %v453, %v428
  %v570 = vmul.f32 %v455, %v429
  %v571 = vmul.f32 %v457, %v429
  %v572 = vmul.f32 %v459, %v429
  %v573 = vmul.f32 %v461, %v429
  %vm574 = vcmp.lt.s32.totalorder %v342, 2
  %vm575 = vcmp.lt.s32.totalorder %v343, 2
  %vm576 = vcmp.lt.s32.totalorder %v344, 2
  %vm577 = vcmp.lt.s32.totalorder %v345, 2
  %vm578 = vcmp.lt.s32.totalorder %v342, 4
  %vm579 = vcmp.lt.s32.totalorder %v343, 4
  %vm580 = vcmp.lt.s32.totalorder %v344, 4
  %vm581 = vcmp.lt.s32.totalorder %v345, 4
  %v582 = vsel %vm578, 1, 0
  %v583 = vsel %vm579, 1, 0
  %v584 = vsel %vm580, 1, 0
  %v585 = vsel %vm581, 1, 0
  %vm586 = vcmp.eq.s32.totalorder %v582, 1
  %vm587 = vcmp.eq.s32.totalorder %v583, 1
  %vm588 = vcmp.eq.s32.totalorder %v584, 1
  %vm589 = vcmp.eq.s32.totalorder %v585, 1
  %v590 = vsel %vm586, %v558, %v526
  %v591 = vsel %vm586, %v559, %v527
  %v592 = vsel %vm586, %v560, %v528
  %v593 = vsel %vm586, %v561, %v529
  %v594 = vsel %vm587, %v562, %v530
  %v595 = vsel %vm587, %v563, %v531
  %v596 = vsel %vm587, %v564, %v532
  %v597 = vsel %vm587, %v565, %v533
  %v598 = vsel %vm588, %v566, %v534
  %v599 = vsel %vm588, %v567, %v535
  %v600 = vsel %vm588, %v568, %v536
  %v601 = vsel %vm588, %v569, %v537
  %v602 = vsel %vm589, %v570, %v538
  %v603 = vsel %vm589, %v571, %v539
  %v604 = vsel %vm589, %v572, %v540
  %v605 = vsel %vm589, %v573, %v541
  %v606 = vsel %vm574, 1, 0
  %v607 = vsel %vm575, 1, 0
  %v608 = vsel %vm576, 1, 0
  %v609 = vsel %vm577, 1, 0
  %vm610 = vcmp.eq.s32.totalorder %v606, 1
  %vm611 = vcmp.eq.s32.totalorder %v607, 1
  %vm612 = vcmp.eq.s32.totalorder %v608, 1
  %vm613 = vcmp.eq.s32.totalorder %v609, 1
  %v614 = vsel %vm610, %v542, %v590
  %v615 = vsel %vm610, %v543, %v591
  %v616 = vsel %vm610, %v544, %v592
  %v617 = vsel %vm610, %v545, %v593
  %v618 = vsel %vm611, %v546, %v594
  %v619 = vsel %vm611, %v547, %v595
  %v620 = vsel %vm611, %v548, %v596
  %v621 = vsel %vm611, %v549, %v597
  %v622 = vsel %vm612, %v550, %v598
  %v623 = vsel %vm612, %v551, %v599
  %v624 = vsel %vm612, %v552, %v600
  %v625 = vsel %vm612, %v553, %v601
  %v626 = vsel %vm613, %v554, %v602
  %v627 = vsel %vm613, %v555, %v603
  %v628 = vsel %vm613, %v556, %v604
  %v629 = vsel %vm613, %v557, %v605
  %630 = vst [vmem:[%s2] sm:$0xff] %v614
  %631 = vst [vmem:[%s2 + $0x8] sm:$0xff] %v615
  %632 = vst [vmem:[%s2 + $0x10] sm:$0xff] %v616
  %633 = vst [vmem:[%s2 + $0x18] sm:$0xff] %v617
  %634 = vst [vmem:[%s2 + $0x20] sm:$0xff] %v618
  %635 = vst [vmem:[%s2 + $0x28] sm:$0xff] %v619
  %636 = vst [vmem:[%s2 + $0x30] sm:$0xff] %v620
  %637 = vst [vmem:[%s2 + $0x38] sm:$0xff] %v621
  %638 = vst [vmem:[%s2 + $0x40] sm:$0xff] %v622
  %639 = vst [vmem:[%s2 + $0x48] sm:$0xff] %v623
  %640 = vst [vmem:[%s2 + $0x50] sm:$0xff] %v624
  %641 = vst [vmem:[%s2 + $0x58] sm:$0xff] %v625
  %642 = vst [vmem:[%s2 + $0x60] sm:$0xff] %v626
  %643 = vst [vmem:[%s2 + $0x68] sm:$0xff] %v627
  %644 = vst [vmem:[%s2 + $0x70] sm:$0xff] %v628
  %645 = vst [vmem:[%s2 + $0x78] sm:$0xff] %v629
  // Predicated region
  $region10: #{_lambda_.15} parent=0 // pred_check
    _
  $region11: #{_lambda_.15} parent=0 // pred_check_branch
    %647 = sbr.rel (0) target = $region13
  $region12: #{_lambda_.15} parent=0 // pred_region
    _
  $region13: #{_lambda_.15} parent=0 // pred_fallthru
    _
  // Predicated region
  $region14: #{_lambda_.15} parent=0 // pred_check
    _
  $region15: #{_lambda_.15} parent=0 // pred_check_branch
    %649 = sbr.rel (0) target = $region17
  $region16: #{_lambda_.15} parent=0 // pred_region
    _
  $region17: #{_lambda_.15} parent=0 // pred_fallthru
    _

// kernel: _lambda_.12
$region0: #{_lambda_.12}
  #allocation0 [shape = 'u32[]', space=smem, size = 0x4, offset = 0x4, fixed_abs, tag = 'smem constant byte address 0x4 - core index']
  #allocation1 [shape = 'u32[144,128]{1,0:T(1,128)}', space=vmem, size = 0x12000, scoped, tag = 'internal scratch']
  %s0 = inlined_call_operand.vmem [shape: bf16[32,256], index: 0, kind: input, shape index: {}]
  %s1 = inlined_call_operand.vmem [shape: bf16[256,128], index: 1, kind: input, shape index: {}]
  %s2 = inlined_call_operand.vmem [shape: bf16[32,128], index: 2, kind: output, shape index: {}]
  %s3 = sld [smem:[#allocation0]]
  $region18: #{_lambda_.12} parent=0
    _
  %s5 = ssub.s32 1, %s3
  %s6 = scalar_select 0, %s5, %s3
  // Predicated region
  $region2: #{_lambda_.12} parent=0 // pred_check
    _
  $region3: #{_lambda_.12} parent=0 // pred_check_branch
    %8 = sbr.rel (0) target = $region5
  $region4: #{_lambda_.12} parent=0 // pred_region
    _
  $region5: #{_lambda_.12} parent=0 // pred_fallthru
    _
  // Predicated region
  $region6: #{_lambda_.12} parent=0 // pred_check
    _
  $region7: #{_lambda_.12} parent=0 // pred_check_branch
    %10 = sbr.rel (0) target = $region9
  $region8: #{_lambda_.12} parent=0 // pred_region
    _
  $region9: #{_lambda_.12} parent=0 // pred_fallthru
    _
  %v12 = vld [vmem:[%s0] sm:$0xff]
  %v13 = vld [vmem:[%s0 + $0x8] sm:$0xff]
  %v14 = vld [vmem:[%s0 + $0x10] sm:$0xff]
  %v15 = vld [vmem:[%s0 + $0x18] sm:$0xff]
  %v16 = vld [vmem:[%s1] sm:$0xf]
  %v17 = vld [vmem:[%s1 + $0x4] sm:$0xf]
  %v18 = vld [vmem:[%s1 + $0x8] sm:$0xf]
  %v19 = vld [vmem:[%s1 + $0xc] sm:$0xf]
  %v20 = vld [vmem:[%s1 + $0x10] sm:$0xf]
  %v21 = vld [vmem:[%s1 + $0x14] sm:$0xf]
  %v22 = vld [vmem:[%s1 + $0x18] sm:$0xf]
  %v23 = vld [vmem:[%s1 + $0x1c] sm:$0xf]
  %v24 = vld [vmem:[%s1 + $0x20] sm:$0xf]
  %v25 = vld [vmem:[%s1 + $0x24] sm:$0xf]
  %v26 = vld [vmem:[%s1 + $0x28] sm:$0xf]
  %v27 = vld [vmem:[%s1 + $0x2c] sm:$0xf]
  %v28 = vld [vmem:[%s1 + $0x30] sm:$0xf]
  %v29 = vld [vmem:[%s1 + $0x34] sm:$0xf]
  %v30 = vld [vmem:[%s1 + $0x38] sm:$0xf]
  %v31 = vld [vmem:[%s1 + $0x3c] sm:$0xf]
  %v32 = vld [vmem:[%s1 + $0x40] sm:$0xf]
  %v33 = vld [vmem:[%s1 + $0x44] sm:$0xf]
  %v34 = vld [vmem:[%s1 + $0x48] sm:$0xf]
  %v35 = vld [vmem:[%s1 + $0x4c] sm:$0xf]
  %v36 = vld [vmem:[%s1 + $0x50] sm:$0xf]
  %v37 = vld [vmem:[%s1 + $0x54] sm:$0xf]
  %v38 = vld [vmem:[%s1 + $0x58] sm:$0xf]
  %v39 = vld [vmem:[%s1 + $0x5c] sm:$0xf]
  %v40 = vld [vmem:[%s1 + $0x60] sm:$0xf]
  %v41 = vld [vmem:[%s1 + $0x64] sm:$0xf]
  %v42 = vld [vmem:[%s1 + $0x68] sm:$0xf]
  %v43 = vld [vmem:[%s1 + $0x6c] sm:$0xf]
  %v44 = vld [vmem:[%s1 + $0x70] sm:$0xf]
  %v45 = vld [vmem:[%s1 + $0x74] sm:$0xf]
  %v46 = vld [vmem:[%s1 + $0x78] sm:$0xf]
  %v47 = vld [vmem:[%s1 + $0x7c] sm:$0xf]
  %v52 = vunpack.c.l.b16 %v12
  %v53 = vunpack.c.h.b16 %v12
  %v54 = vunpack.c.l.b16 %v13
  %v55 = vunpack.c.h.b16 %v13
  %v56 = vunpack.c.l.b16 %v14
  %v57 = vunpack.c.h.b16 %v14
  %v58 = vunpack.c.l.b16 %v15
  %v59 = vunpack.c.h.b16 %v15
  %v60 = vpack.c.b16 %v54, %v52
  %v61 = vpack.c.b16 %v55, %v53
  %v62 = vpack.c.b16 %v58, %v56
  %v63 = vpack.c.b16 %v59, %v57
  %v100 = vunpack.c.l.b16 %v16
  %v101 = vunpack.c.l.b16 %v17
  %v102 = vunpack.c.l.b16 %v18
  %v103 = vunpack.c.l.b16 %v19
  %v104 = vunpack.c.l.b16 %v20
  %v105 = vunpack.c.l.b16 %v21
  %v106 = vunpack.c.l.b16 %v22
  %v107 = vunpack.c.l.b16 %v23
  %v108 = vunpack.c.l.b16 %v24
  %v109 = vunpack.c.l.b16 %v25
  %v110 = vunpack.c.l.b16 %v26
  %v111 = vunpack.c.l.b16 %v27
  %v112 = vunpack.c.l.b16 %v28
  %v113 = vunpack.c.l.b16 %v29
  %v114 = vunpack.c.l.b16 %v30
  %v115 = vunpack.c.l.b16 %v31
  %v116 = vunpack.c.l.b16 %v32
  %v117 = vunpack.c.l.b16 %v33
  %v118 = vunpack.c.l.b16 %v34
  %v119 = vunpack.c.l.b16 %v35
  %v120 = vunpack.c.l.b16 %v36
  %v121 = vunpack.c.l.b16 %v37
  %v122 = vunpack.c.l.b16 %v38
  %v123 = vunpack.c.l.b16 %v39
  %v124 = vunpack.c.l.b16 %v40
  %v125 = vunpack.c.l.b16 %v41
  %v126 = vunpack.c.l.b16 %v42
  %v127 = vunpack.c.l.b16 %v43
  %v128 = vunpack.c.l.b16 %v44
  %v129 = vunpack.c.l.b16 %v45
  %v130 = vunpack.c.l.b16 %v46
  %v131 = vunpack.c.l.b16 %v47
  %v132 = vpack.c.b16 %v101, %v100
  %v133 = vpack.c.b16 %v103, %v102
  %v134 = vpack.c.b16 %v105, %v104
  %v135 = vpack.c.b16 %v107, %v106
  %v136 = vpack.c.b16 %v109, %v108
  %v137 = vpack.c.b16 %v111, %v110
  %v138 = vpack.c.b16 %v113, %v112
  %v139 = vpack.c.b16 %v115, %v114
  %v140 = vpack.c.b16 %v117, %v116
  %v141 = vpack.c.b16 %v119, %v118
  %v142 = vpack.c.b16 %v121, %v120
  %v143 = vpack.c.b16 %v123, %v122
  %v144 = vpack.c.b16 %v125, %v124
  %v145 = vpack.c.b16 %v127, %v126
  %v146 = vpack.c.b16 %v129, %v128
  %v147 = vpack.c.b16 %v131, %v130
  %164 = vmatprep.subr.bf16.mxu0 0
  %165 = vmatpush1.bf16.msra.mxu0 %v132
  %166 = vmatprep.subr.bf16.mxu0 0
  %167 = vmatpush1.bf16.msra.mxu0 %v133
  %168 = vmatprep.subr.bf16.mxu0 0
  %169 = vmatpush1.bf16.msra.mxu0 %v134
  %170 = vmatprep.subr.bf16.mxu0 0
  %171 = vmatpush1.bf16.msra.mxu0 %v135
  %172 = vmatprep.subr.bf16.mxu0 0
  %173 = vmatpush1.bf16.msra.mxu0 %v136
  %174 = vmatprep.subr.bf16.mxu0 0
  %175 = vmatpush1.bf16.msra.mxu0 %v137
  %176 = vmatprep.subr.bf16.mxu0 0
  %177 = vmatpush1.bf16.msra.mxu0 %v138
  %178 = vmatprep.subr.bf16.mxu0 0
  %179 = vmatpush1.bf16.msra.mxu0 %v139
  %180 = vmatprep.subr.bf16.mxu0 0
  %181 = vmatpush1.bf16.msra.mxu0 %v140
  %182 = vmatprep.subr.bf16.mxu0 0
  %183 = vmatpush1.bf16.msra.mxu0 %v141
  %184 = vmatprep.subr.bf16.mxu0 0
  %185 = vmatpush1.bf16.msra.mxu0 %v142
  %186 = vmatprep.subr.bf16.mxu0 0
  %187 = vmatpush1.bf16.msra.mxu0 %v143
  %188 = vmatprep.subr.bf16.mxu0 0
  %189 = vmatpush1.bf16.msra.mxu0 %v144
  %190 = vmatprep.subr.bf16.mxu0 0
  %191 = vmatpush1.bf16.msra.mxu0 %v145
  %192 = vmatprep.subr.bf16.mxu0 0
  %193 = vmatpush1.bf16.msra.mxu0 %v146
  %194 = vmatprep.subr.bf16.mxu0 0
  %195 = vmatpush1.bf16.msra.mxu0 %v147
  %196 = vmatprep.mubr.bf16.mxu0 %v61
  %197 = vmatmul.mubr.bf16.gmra.mrb[0].mxu0 %v60
  %v198 = vpop.f32.mrb[0].mxu0
  %v199 = vadd.f32 0.0, %v198
  %v200 = vpop.f32.mrb[0].mxu0
  %v201 = vpop.f32.mrb[0].mxu0
  %v202 = vadd.f32 0.0, %v201
  %v203 = vpop.f32.mrb[0].mxu0
  %204 = vmatprep.mubr.bf16.mxu0 %v63
  %205 = vmatmul.mubr.bf16.gmra.mrb[0].mxu0 %v62
  %v206 = vpop.f32.mrb[0].mxu0
  %v207 = vadd.f32 0.0, %v206
  %v208 = vpop.f32.mrb[0].mxu0
  %v209 = vpop.f32.mrb[0].mxu0
  %v210 = vadd.f32 0.0, %v209
  %v211 = vpop.f32.mrb[0].mxu0
  %212 = vdwg.mxu0
  %v213 = vmul.f32 %v199, 0.1
  %v214 = vmul.f32 %v202, 0.1
  %v215 = vmul.f32 %v207, 0.1
  %v216 = vmul.f32 %v210, 0.1
  %v217 = vmax.f32 %v199, %v213
  %v218 = vmax.f32 %v202, %v214
  %v219 = vmax.f32 %v207, %v215
  %v220 = vmax.f32 %v210, %v216
  %v221 = vpack.c.bf16 %v218, %v217
  %v222 = vpack.c.bf16 %v220, %v219
  %v225 = vunpack.c.l.b16 %v221
  %v226 = vunpack.c.h.b16 %v221
  %v227 = vunpack.c.l.b16 %v222
  %v228 = vunpack.c.h.b16 %v222
  %v229 = vpack.c.b16 %v225, %v225
  %v230 = vpack.c.b16 %v226, %v226
  %v231 = vpack.c.b16 %v227, %v227
  %v232 = vpack.c.b16 %v228, %v228
  %237 = vst [vmem:[%s2] sm:$0xf] %v229
  %238 = vst [vmem:[%s2 + $0x4] sm:$0xf] %v230
  %239 = vst [vmem:[%s2 + $0x8] sm:$0xf] %v231
  %240 = vst [vmem:[%s2 + $0xc] sm:$0xf] %v232
  // Predicated region
  $region10: #{_lambda_.12} parent=0 // pred_check
    _
  $region11: #{_lambda_.12} parent=0 // pred_check_branch
    %242 = sbr.rel (0) target = $region13
  $region12: #{_lambda_.12} parent=0 // pred_region
    _
  $region13: #{_lambda_.12} parent=0 // pred_fallthru
    _
  // Predicated region
  $region14: #{_lambda_.12} parent=0 // pred_check
    _
  $region15: #{_lambda_.12} parent=0 // pred_check_branch
    %244 = sbr.rel (0) target = $region17
  $region16: #{_lambda_.12} parent=0 // pred_region
    _
  $region17: #{_lambda_.12} parent=0 // pred_fallthru
    _

// kernel: _lambda_.13
$region0: #{_lambda_.13}
  #allocation0 [shape = 'u32[]', space=smem, size = 0x4, offset = 0x4, fixed_abs, tag = 'smem constant byte address 0x4 - core index']
  #allocation1 [shape = 'u32[144,128]{1,0:T(1,128)}', space=vmem, size = 0x12000, scoped, tag = 'internal scratch']
  %s0 = inlined_call_operand.vmem [shape: bf16[32,128], index: 0, kind: input, shape index: {}]
  %s1 = inlined_call_operand.vmem [shape: bf16[128,128], index: 1, kind: input, shape index: {}]
  %s2 = inlined_call_operand.vmem [shape: f32[32,128], index: 2, kind: output, shape index: {}]
  %s3 = sld [smem:[#allocation0]]
  $region18: #{_lambda_.13} parent=0
    _
  %s5 = ssub.s32 1, %s3
  %s6 = scalar_select 0, %s5, %s3
  // Predicated region
  $region2: #{_lambda_.13} parent=0 // pred_check
    _
  $region3: #{_lambda_.13} parent=0 // pred_check_branch
    %8 = sbr.rel (0) target = $region5
  $region4: #{_lambda_.13} parent=0 // pred_region
    _
  $region5: #{_lambda_.13} parent=0 // pred_fallthru
    _
  // Predicated region
  $region6: #{_lambda_.13} parent=0 // pred_check
    _
  $region7: #{_lambda_.13} parent=0 // pred_check_branch
    %10 = sbr.rel (0) target = $region9
  $region8: #{_lambda_.13} parent=0 // pred_region
    _
  $region9: #{_lambda_.13} parent=0 // pred_fallthru
    _
  %v12 = vld [vmem:[%s0] sm:$0xf]
  %v13 = vld [vmem:[%s0 + $0x4] sm:$0xf]
  %v14 = vld [vmem:[%s0 + $0x8] sm:$0xf]
  %v15 = vld [vmem:[%s0 + $0xc] sm:$0xf]
  %v16 = vld [vmem:[%s1] sm:$0xf]
  %v17 = vld [vmem:[%s1 + $0x4] sm:$0xf]
  %v18 = vld [vmem:[%s1 + $0x8] sm:$0xf]
  %v19 = vld [vmem:[%s1 + $0xc] sm:$0xf]
  %v20 = vld [vmem:[%s1 + $0x10] sm:$0xf]
  %v21 = vld [vmem:[%s1 + $0x14] sm:$0xf]
  %v22 = vld [vmem:[%s1 + $0x18] sm:$0xf]
  %v23 = vld [vmem:[%s1 + $0x1c] sm:$0xf]
  %v24 = vld [vmem:[%s1 + $0x20] sm:$0xf]
  %v25 = vld [vmem:[%s1 + $0x24] sm:$0xf]
  %v26 = vld [vmem:[%s1 + $0x28] sm:$0xf]
  %v27 = vld [vmem:[%s1 + $0x2c] sm:$0xf]
  %v28 = vld [vmem:[%s1 + $0x30] sm:$0xf]
  %v29 = vld [vmem:[%s1 + $0x34] sm:$0xf]
  %v30 = vld [vmem:[%s1 + $0x38] sm:$0xf]
  %v31 = vld [vmem:[%s1 + $0x3c] sm:$0xf]
  %v36 = vunpack.c.l.b16 %v12
  %v37 = vunpack.c.l.b16 %v13
  %v38 = vunpack.c.l.b16 %v14
  %v39 = vunpack.c.l.b16 %v15
  %v40 = vpack.c.b16 %v37, %v36
  %v41 = vpack.c.b16 %v39, %v38
  %v60 = vunpack.c.l.b16 %v16
  %v61 = vunpack.c.l.b16 %v17
  %v62 = vunpack.c.l.b16 %v18
  %v63 = vunpack.c.l.b16 %v19
  %v64 = vunpack.c.l.b16 %v20
  %v65 = vunpack.c.l.b16 %v21
  %v66 = vunpack.c.l.b16 %v22
  %v67 = vunpack.c.l.b16 %v23
  %v68 = vunpack.c.l.b16 %v24
  %v69 = vunpack.c.l.b16 %v25
  %v70 = vunpack.c.l.b16 %v26
  %v71 = vunpack.c.l.b16 %v27
  %v72 = vunpack.c.l.b16 %v28
  %v73 = vunpack.c.l.b16 %v29
  %v74 = vunpack.c.l.b16 %v30
  %v75 = vunpack.c.l.b16 %v31
  %v76 = vpack.c.b16 %v61, %v60
  %v77 = vpack.c.b16 %v63, %v62
  %v78 = vpack.c.b16 %v65, %v64
  %v79 = vpack.c.b16 %v67, %v66
  %v80 = vpack.c.b16 %v69, %v68
  %v81 = vpack.c.b16 %v71, %v70
  %v82 = vpack.c.b16 %v73, %v72
  %v83 = vpack.c.b16 %v75, %v74
  %92 = vmatprep.subr.bf16.mxu0 0
  %93 = vmatpush1.bf16.msra.mxu0 %v76
  %94 = vmatprep.subr.bf16.mxu0 0
  %95 = vmatpush1.bf16.msra.mxu0 %v77
  %96 = vmatprep.subr.bf16.mxu0 0
  %97 = vmatpush1.bf16.msra.mxu0 %v78
  %98 = vmatprep.subr.bf16.mxu0 0
  %99 = vmatpush1.bf16.msra.mxu0 %v79
  %100 = vmatprep.subr.bf16.mxu0 0
  %101 = vmatpush1.bf16.msra.mxu0 %v80
  %102 = vmatprep.subr.bf16.mxu0 0
  %103 = vmatpush1.bf16.msra.mxu0 %v81
  %104 = vmatprep.subr.bf16.mxu0 0
  %105 = vmatpush1.bf16.msra.mxu0 %v82
  %106 = vmatprep.subr.bf16.mxu0 0
  %107 = vmatpush1.bf16.msra.mxu0 %v83
  %108 = vmatprep.subr.bf16.mxu0 0
  %109 = vmatpush1.bf16.msra.mxu0 0
  %110 = vmatprep.subr.bf16.mxu0 0
  %111 = vmatpush1.bf16.msra.mxu0 0
  %112 = vmatprep.subr.bf16.mxu0 0
  %113 = vmatpush1.bf16.msra.mxu0 0
  %114 = vmatprep.subr.bf16.mxu0 0
  %115 = vmatpush1.bf16.msra.mxu0 0
  %116 = vmatprep.subr.bf16.mxu0 0
  %117 = vmatpush1.bf16.msra.mxu0 0
  %118 = vmatprep.subr.bf16.mxu0 0
  %119 = vmatpush1.bf16.msra.mxu0 0
  %120 = vmatprep.subr.bf16.mxu0 0
  %121 = vmatpush1.bf16.msra.mxu0 0
  %122 = vmatprep.subr.bf16.mxu0 0
  %123 = vmatpush1.bf16.msra.mxu0 0
  %124 = vmatprep.mubr.bf16.mxu0 0
  %125 = vmatmul.mubr.bf16.gmra.mrb[0].mxu0 %v40
  %v126 = vpop.f32.mrb[0].mxu0
  %v127 = vadd.f32 0.0, %v126
  %v128 = vpop.f32.mrb[0].mxu0
  %v129 = vpop.f32.mrb[0].mxu0
  %v130 = vadd.f32 0.0, %v129
  %v131 = vpop.f32.mrb[0].mxu0
  %132 = vmatprep.mubr.bf16.mxu0 0
  %133 = vmatmul.mubr.bf16.gmra.mrb[0].mxu0 %v41
  %v134 = vpop.f32.mrb[0].mxu0
  %v135 = vadd.f32 0.0, %v134
  %v136 = vpop.f32.mrb[0].mxu0
  %v137 = vpop.f32.mrb[0].mxu0
  %v138 = vadd.f32 0.0, %v137
  %v139 = vpop.f32.mrb[0].mxu0
  %140 = vdwg.mxu0
  %s141 = smul.u32 0, 128
  %v142 = vlaneseq
  %v143 = vshrl.u32 %v142, 7
  %v144 = vadd.s32 %v143, 8
  %v145 = vadd.s32 %v143, 16
  %v146 = vadd.s32 %v143, 24
  %v147 = vlaneseq
  %v148 = vand.u32 %v147, 127
  %v149 = vstv %s141
  %v150 = vadd.s32 %v148, %v149
  %v151 = vand.u32 %v143, 7
  %v152 = vand.u32 %v144, 7
  %v153 = vand.u32 %v145, 7
  %v154 = vand.u32 %v146, 7
  %v155 = vshra.s32 %v143, 3
  %v156 = vshra.s32 %v144, 3
  %v157 = vshra.s32 %v145, 3
  %v158 = vshra.s32 %v146, 3
  %v159 = vand.u32 %v150, 3
  %v160 = vshra.s32 %v150, 2
  %v161 = vand.u32 %v160, 3
  %v162 = vcvt.s32.f32 %v159
  %v163 = vcvt.s32.f32 %v161
  %vm164 = vcmp.eq.s32.totalorder %v155, 1
  %vm165 = vcmp.eq.s32.totalorder %v156, 1
  %vm166 = vcmp.eq.s32.totalorder %v157, 1
  %vm167 = vcmp.eq.s32.totalorder %v158, 1
  %v168 = vsel %vm164, 4.0, 6.0
  %v169 = vsel %vm165, 4.0, 6.0
  %v170 = vsel %vm166, 4.0, 6.0
  %v171 = vsel %vm167, 4.0, 6.0
  %v172 = vsel %vm164, 5.0, 8.0
  %v173 = vsel %vm165, 5.0, 8.0
  %v174 = vsel %vm166, 5.0, 8.0
  %v175 = vsel %vm167, 5.0, 8.0
  %vm176 = vcmp.eq.s32.totalorder %v155, 0
  %vm177 = vcmp.eq.s32.totalorder %v156, 0
  %vm178 = vcmp.eq.s32.totalorder %v157, 0
  %vm179 = vcmp.eq.s32.totalorder %v158, 0
  %v180 = vsel %vm176, 2.0, %v168
  %v181 = vsel %vm177, 2.0, %v169
  %v182 = vsel %vm178, 2.0, %v170
  %v183 = vsel %vm179, 2.0, %v171
  %v184 = vsel %vm176, 3.0, %v172
  %v185 = vsel %vm177, 3.0, %v173
  %v186 = vsel %vm178, 3.0, %v174
  %v187 = vsel %vm179, 3.0, %v175
  %vm188 = vcmp.eq.s32.totalorder %v151, 0
  %vm189 = vcmp.eq.s32.totalorder %v152, 0
  %vm190 = vcmp.eq.s32.totalorder %v153, 0
  %vm191 = vcmp.eq.s32.totalorder %v154, 0
  %v192 = vsel %vm188, 1, 0
  %v193 = vsel %vm189, 1, 0
  %v194 = vsel %vm190, 1, 0
  %v195 = vsel %vm191, 1, 0
  %vm196 = vcmp.eq.s32.totalorder %v192, 1
  %vm197 = vcmp.eq.s32.totalorder %v193, 1
  %vm198 = vcmp.eq.s32.totalorder %v194, 1
  %vm199 = vcmp.eq.s32.totalorder %v195, 1
  %v200 = vsel %vm196, %v162, %v163
  %v201 = vsel %vm197, %v162, %v163
  %v202 = vsel %vm198, %v162, %v163
  %v203 = vsel %vm199, %v162, %v163
  %vm204 = vcmp.eq.s32.totalorder %v151, 2
  %vm205 = vcmp.eq.s32.totalorder %v152, 2
  %vm206 = vcmp.eq.s32.totalorder %v153, 2
  %vm207 = vcmp.eq.s32.totalorder %v154, 2
  %v208 = vsel %vm204, %v180, %v184
  %v209 = vsel %vm205, %v181, %v185
  %v210 = vsel %vm206, %v182, %v186
  %v211 = vsel %vm207, %v183, %v187
  %v212 = vmul.f32 %v127, 1.442695
  %v213 = vpow.pop %v212
  %v214 = vmul.f32 %v130, 1.442695
  %v215 = vpow.pop %v214
  %v216 = vmul.f32 %v135, 1.442695
  %v217 = vpow.pop %v216
  %v218 = vmul.f32 %v138, 1.442695
  %v219 = vpow.pop %v218
  %vm220 = vcmp.gt.f32.partialorder %v127, 20.0
  %vm221 = vcmp.gt.f32.partialorder %v130, 20.0
  %vm222 = vcmp.gt.f32.partialorder %v135, 20.0
  %vm223 = vcmp.gt.f32.partialorder %v138, 20.0
  %v224 = vadd.f32 %v213, 1.0
  %v225 = vadd.f32 %v215, 1.0
  %v226 = vadd.f32 %v217, 1.0
  %v227 = vadd.f32 %v219, 1.0
  %v228 = vrcp.pop %v224
  %v229 = vmul.f32 %v213, %v228
  %v230 = vrcp.pop %v225
  %v231 = vmul.f32 %v215, %v230
  %v232 = vrcp.pop %v226
  %v233 = vmul.f32 %v217, %v232
  %v234 = vrcp.pop %v227
  %v235 = vmul.f32 %v219, %v234
  %v236 = vsel %vm220, 1.0, %v229
  %v237 = vsel %vm221, 1.0, %v231
  %v238 = vsel %vm222, 1.0, %v233
  %v239 = vsel %vm223, 1.0, %v235
  %v240 = vadd.f32 %v236, %v200
  %v241 = vadd.f32 %v237, %v201
  %v242 = vadd.f32 %v238, %v202
  %v243 = vadd.f32 %v239, %v203
  %v244 = vmul.f32 %v240, 4.0
  %v245 = vmul.f32 %v241, 4.0
  %v246 = vmul.f32 %v242, 4.0
  %v247 = vmul.f32 %v243, 4.0
  %v248 = vmul.f32 %v213, %v208
  %v249 = vmul.f32 %v215, %v209
  %v250 = vmul.f32 %v217, %v210
  %v251 = vmul.f32 %v219, %v211
  %vm252 = vcmp.lt.s32.totalorder %v151, 2
  %vm253 = vcmp.lt.s32.totalorder %v152, 2
  %vm254 = vcmp.lt.s32.totalorder %v153, 2
  %vm255 = vcmp.lt.s32.totalorder %v154, 2
  %vm256 = vcmp.lt.s32.totalorder %v151, 4
  %vm257 = vcmp.lt.s32.totalorder %v152, 4
  %vm258 = vcmp.lt.s32.totalorder %v153, 4
  %vm259 = vcmp.lt.s32.totalorder %v154, 4
  %v260 = vsel %vm256, 1, 0
  %v261 = vsel %vm257, 1, 0
  %v262 = vsel %vm258, 1, 0
  %v263 = vsel %vm259, 1, 0
  %vm264 = vcmp.eq.s32.totalorder %v260, 1
  %vm265 = vcmp.eq.s32.totalorder %v261, 1
  %vm266 = vcmp.eq.s32.totalorder %v262, 1
  %vm267 = vcmp.eq.s32.totalorder %v263, 1
  %v268 = vsel %vm264, %v248, %v236
  %v269 = vsel %vm265, %v249, %v237
  %v270 = vsel %vm266, %v250, %v238
  %v271 = vsel %vm267, %v251, %v239
  %v272 = vsel %vm252, 1, 0
  %v273 = vsel %vm253, 1, 0
  %v274 = vsel %vm254, 1, 0
  %v275 = vsel %vm255, 1, 0
  %vm276 = vcmp.eq.s32.totalorder %v272, 1
  %vm277 = vcmp.eq.s32.totalorder %v273, 1
  %vm278 = vcmp.eq.s32.totalorder %v274, 1
  %vm279 = vcmp.eq.s32.totalorder %v275, 1
  %v280 = vsel %vm276, %v244, %v268
  %v281 = vsel %vm277, %v245, %v269
  %v282 = vsel %vm278, %v246, %v270
  %v283 = vsel %vm279, %v247, %v271
  %284 = vst [vmem:[%s2] sm:$0xff] %v280
  %285 = vst [vmem:[%s2 + $0x8] sm:$0xff] %v281
  %286 = vst [vmem:[%s2 + $0x10] sm:$0xff] %v282
  %287 = vst [vmem:[%s2 + $0x18] sm:$0xff] %v283
  // Predicated region
  $region10: #{_lambda_.13} parent=0 // pred_check
    _
  $region11: #{_lambda_.13} parent=0 // pred_check_branch
    %289 = sbr.rel (0) target = $region13
  $region12: #{_lambda_.13} parent=0 // pred_region
    _
  $region13: #{_lambda_.13} parent=0 // pred_fallthru
    _
  // Predicated region
  $region14: #{_lambda_.13} parent=0 // pred_check
    _
  $region15: #{_lambda_.13} parent=0 // pred_check_branch
    %291 = sbr.rel (0) target = $region17
  $region16: #{_lambda_.13} parent=0 // pred_region
    _
  $region17: #{_lambda_.13} parent=0 // pred_fallthru
    _

</llo_original>
